<compile_context>
chip_gen: v5e
topology: v5e:2x2
jax: 0.10.0
libtpu: 0.0.40
codegen_flags: <defaults>
</compile_context>

<pallas_src>
import functools

import jax
import jax.numpy as jnp
from jax.experimental import pallas as pl
from jax.experimental.pallas import tpu as pltpu


# ---------------------------------------------------------------------------
# Fused Pallas kernel: num_layers x LSTM over time + FC, all in VMEM
# ---------------------------------------------------------------------------

def _fused_lstm_fc_kernel(num_layers, hidden_dim, *refs):
    """Ref layout: (x, [Wx_l, Wh_l, b_l] * L, Wfc, bfc, out, hseq_scratch).

    x:    (B, T, D)     batch_first input, consumed directly
    Wx_l: (in_d, 4H)    input->gate weights (in_d = D for layer 0, else H)
    Wh_l: (H, 4H)       recurrent weights
    b_l:  (1, 4H)       folded bias (b_ih + b_hh), f32
    Wfc:  (H, O), bfc: (1, O)   final linear
    out:  (B, O)
    hseq: (T, B, H)     VMEM scratch holding the layer-below hidden sequence
    Gate order along the 4H axis is PyTorch's [i, f, g, o].
    """
    x_ref = refs[0]
    layer_refs = [(refs[1 + 3 * l], refs[2 + 3 * l], refs[3 + 3 * l])
                  for l in range(num_layers)]
    wfc_ref = refs[1 + 3 * num_layers]
    bfc_ref = refs[2 + 3 * num_layers]
    out_ref = refs[3 + 3 * num_layers]
    hseq_ref = refs[4 + 3 * num_layers]

    B, T, D = x_ref.shape
    H = hidden_dim
    f32 = jnp.float32

    def cell(gates, c):
        # 4H = 128 lanes: one full-width EUP sigmoid + one full-width tanh
        # cover all four gates; gate blocks are then static 32-lane slices.
        sig = jax.nn.sigmoid(gates)
        tnh = jnp.tanh(gates)
        i_g = sig[:, 0 * H:1 * H]
        f_g = sig[:, 1 * H:2 * H]
        g_g = tnh[:, 2 * H:3 * H]
        o_g = sig[:, 3 * H:4 * H]
        c_new = f_g * c + i_g * g_g
        h_new = o_g * jnp.tanh(c_new)
        return h_new, c_new

    # ---- Layer-major recurrence -------------------------------------------
    # For every layer, the input projection over ALL T steps is one hoisted
    # (rows, in_d) @ (in_d, 4H) matmul (throughput-friendly, off the serial
    # path); only h @ W_hh (K = H) sits on the per-timestep dependency chain.
    seq2d = x_ref[...].reshape(B * T, D)          # layer-0 rows (batch-major)

    h = jnp.zeros((B, H), f32)
    for layer in range(num_layers):
        wx_ref, wh_ref, b_ref = layer_refs[layer]
        wh = wh_ref[...]

        xp = (jnp.dot(seq2d.astype(wx_ref.dtype), wx_ref[...],
                      preferred_element_type=f32)
              + b_ref[...])                        # (rows, 4H), f32
        if layer == 0:
            # One-time relayout to time-major: replaces T per-step strided
            # (stride-T sublane) reads inside the serial loop with a single
            # transpose outside it.
            xp = jnp.transpose(xp.reshape(B, T, 4 * H), (1, 0, 2))
        else:
            xp = xp.reshape(T, B, 4 * H)           # rows already time-major

        h = jnp.zeros((B, H), f32)
        c = jnp.zeros((B, H), f32)
        not_top = layer + 1 < num_layers
        # T is static and small: fully unrolled; h/c live in vregs.
        # NOTE: for large T switch to lax.fori_loop carrying (h, c) with xp in
        # VMEM scratch (pl.ds + pl.multiple_of) to bound live ranges.
        for t in range(T):
            gates = xp[t] + jnp.dot(h.astype(wh.dtype), wh,
                                    preferred_element_type=f32)
            h, c = cell(gates, c)
            if not_top:
                hseq_ref[t] = h                    # time-major hidden sequence
        if not_top:
            seq2d = hseq_ref[...].reshape(T * B, H)

    # ---- Fused FC on the top layer's final hidden state --------------------
    out_ref[...] = (jnp.dot(h.astype(wfc_ref.dtype), wfc_ref[...],
                            preferred_element_type=f32)
                    + bfc_ref[...]).astype(out_ref.dtype)


# ---------------------------------------------------------------------------
# Parameter init (PyTorch-style shapes / gate order) and one-time layout prep
# ---------------------------------------------------------------------------

def init_params(key, input_dim, hidden_dim, num_layers, output_dim):
    k = 1.0 / (hidden_dim ** 0.5)
    keys = jax.random.split(key, num_layers * 4 + 2)
    idx = 0
    lstm_params = []
    for layer in range(num_layers):
        in_d = input_dim if layer == 0 else hidden_dim
        w_ih = jax.random.uniform(keys[idx], (4 * hidden_dim, in_d),
                                  minval=-k, maxval=k, dtype=jnp.float32); idx += 1
        w_hh = jax.random.uniform(keys[idx], (4 * hidden_dim, hidden_dim),
                                  minval=-k, maxval=k, dtype=jnp.float32); idx += 1
        b_ih = jax.random.uniform(keys[idx], (4 * hidden_dim,),
                                  minval=-k, maxval=k, dtype=jnp.float32); idx += 1
        b_hh = jax.random.uniform(keys[idx], (4 * hidden_dim,),
                                  minval=-k, maxval=k, dtype=jnp.float32); idx += 1
        lstm_params.append((w_ih, w_hh, b_ih, b_hh))
    w_fc = jax.random.uniform(keys[idx], (output_dim, hidden_dim),
                              minval=-k, maxval=k, dtype=jnp.float32); idx += 1
    b_fc = jax.random.uniform(keys[idx], (output_dim,),
                              minval=-k, maxval=k, dtype=jnp.float32)
    return lstm_params, (w_fc, b_fc)


def prepare_params(lstm_params, fc_params, matmul_dtype=jnp.float32):
    """One-time layout prep: transpose to (in_d, 4H) / (H, 4H), fold
    b_ih + b_hh, and cast matmul operand storage (bf16 knob for v6e/v7x)."""
    prepped = []
    for (w_ih, w_hh, b_ih, b_hh) in lstm_params:
        prepped += [
            w_ih.T.astype(matmul_dtype),                    # (in_d, 4H)
            w_hh.T.astype(matmul_dtype),                    # (H, 4H)
            (b_ih + b_hh)[None, :].astype(jnp.float32),     # (1, 4H)
        ]
    w_fc, b_fc = fc_params
    prepped += [w_fc.T.astype(matmul_dtype),                # (H, O)
                b_fc[None, :].astype(jnp.float32)]          # (1, O)
    return prepped


# ---------------------------------------------------------------------------
# Forward passes
# ---------------------------------------------------------------------------

def lstm_forward_pallas(x, prepped, *, num_layers, hidden_dim, output_dim):
    """x: (B, T, D) batch_first, exactly like the PyTorch module. h0 = c0 = 0."""
    B, T, _ = x.shape
    kernel = functools.partial(_fused_lstm_fc_kernel, num_layers, hidden_dim)
    vmem = pl.BlockSpec(memory_space=pltpu.MemorySpace.VMEM)
    n_in = 1 + len(prepped)

    # Scoped-VMEM limit sized from actual residency (weights + x + per-layer
    # xp / hidden-sequence intermediates + output) with headroom, instead of
    # relying on the 16/32 MiB default as H or T grow.
    resident = (int(x.size) * 4
                + sum(int(p.size) * p.dtype.itemsize for p in prepped)
                + num_layers * (T * B * 4 * hidden_dim + T * B * hidden_dim) * 4
                + B * output_dim * 4)
    vmem_limit = int(min(max(4 * resident, 16 * 2**20), 64 * 2**20))

    # NOTE: gridless call -> single TensorCore. A leading batch grid axis with
    # dimension_semantics=("parallel",...) only pays off at B >= ~16 per core.
    return pl.pallas_call(
        kernel,
        out_shape=jax.ShapeDtypeStruct((B, output_dim), jnp.float32),
        in_specs=[vmem] * n_in,
        out_specs=vmem,
        scratch_shapes=[pltpu.VMEM((T, B, hidden_dim), jnp.float32)],
        compiler_params=pltpu.CompilerParams(vmem_limit_bytes=vmem_limit),
    )(x.astype(jnp.float32), *prepped)


def lstm_forward_ref(x, lstm_params, fc_params):
    """Pure-JAX reference (lax.scan) matching nn.LSTM + fc semantics."""
    B = x.shape[0]
    seq = jnp.transpose(x.astype(jnp.float32), (1, 0, 2))
    for (w_ih, w_hh, b_ih, b_hh) in lstm_params:
        H = w_hh.shape[1]

        def step(carry, xt, w_ih=w_ih, w_hh=w_hh, b_ih=b_ih, b_hh=b_hh):
            h, c = carry
            gates = xt @ w_ih.T + b_ih + h @ w_hh.T + b_hh
            i, f, g, o = jnp.split(gates, 4, axis=-1)
            i = jax.nn.sigmoid(i)
            f = jax.nn.sigmoid(f)
            g = jnp.tanh(g)
            o = jax.nn.sigmoid(o)
            c = f * c + i * g
            h = o * jnp.tanh(c)
            return (h, c), h

        init = (jnp.zeros((B, H), jnp.float32), jnp.zeros((B, H), jnp.float32))
        _, seq = jax.lax.scan(step, init, seq)
    w_fc, b_fc = fc_params
    return seq[-1] @ w_fc.T + b_fc


# ---------------------------------------------------------------------------
# Main
# ---------------------------------------------------------------------------

if __name__ == "__main__":
    batch, seq_len = 2, 8
    input_dim, hidden_dim, num_layers, output_dim = 4, 32, 2, 4

    # f32 for exact parity with the reference; set jnp.bfloat16 on v6e/v7x for
    # MXU peak + VMEM headroom (then loosen the tolerance below).
    MATMUL_DTYPE = jnp.float32

    key = jax.random.PRNGKey(0)
    k_x, k_p = jax.random.split(key)
    x = jax.random.normal(k_x, (batch, seq_len, input_dim), dtype=jnp.float32)
    lstm_params, fc_params = init_params(k_p, input_dim, hidden_dim,
                                         num_layers, output_dim)

    # One-time weight layout prep (transpose / bias fold / dtype cast).
    prepped = prepare_params(lstm_params, fc_params, matmul_dtype=MATMUL_DTYPE)

    out = lstm_forward_pallas(x, prepped, num_layers=num_layers,
                              hidden_dim=hidden_dim, output_dim=output_dim)
    out = jax.block_until_ready(out)

    ref = jax.block_until_ready(lstm_forward_ref(x, lstm_params, fc_params))
    assert out.shape == (batch, output_dim)
    assert jnp.allclose(out, ref, atol=1e-4, rtol=1e-4), (out, ref)

    print("KERNEL_OK")
</pallas_src>

<mosaic_0001>
module attributes {stable_mosaic.version = 11 : i64} {
  func.func @_fused_lstm_fc_kernel(%arg0: memref<2x8x4xf32, #tpu.memory_space<vmem>>, %arg1: memref<4x128xf32, #tpu.memory_space<vmem>>, %arg2: memref<32x128xf32, #tpu.memory_space<vmem>>, %arg3: memref<1x128xf32, #tpu.memory_space<vmem>>, %arg4: memref<32x128xf32, #tpu.memory_space<vmem>>, %arg5: memref<32x128xf32, #tpu.memory_space<vmem>>, %arg6: memref<1x128xf32, #tpu.memory_space<vmem>>, %arg7: memref<32x4xf32, #tpu.memory_space<vmem>>, %arg8: memref<1x4xf32, #tpu.memory_space<vmem>>, %arg9: memref<2x4xf32, #tpu.memory_space<vmem>>, %arg10: memref<8x2x32xf32, #tpu.memory_space<vmem>>) attributes {dimension_semantics = [], scalar_prefetch = 0 : i64, scratch_operands = 1 : i64, tpu.core_type = #tpu.core_type<tc>} {
    %c0 = arith.constant 0 : index
    %c0_0 = arith.constant 0 : index
    %c0_1 = arith.constant 0 : index
    %0 = vector.load %arg0[%c0, %c0_0, %c0_1] : memref<2x8x4xf32, #tpu.memory_space<vmem>>, vector<2x8x4xf32>
    %1 = vector.shape_cast %0 : vector<2x8x4xf32> to vector<16x4xf32>
    %c0_2 = arith.constant 0 : index
    %c0_3 = arith.constant 0 : index
    %2 = vector.load %arg2[%c0_2, %c0_3] : memref<32x128xf32, #tpu.memory_space<vmem>>, vector<32x128xf32>
    %c0_4 = arith.constant 0 : index
    %c0_5 = arith.constant 0 : index
    %3 = vector.load %arg1[%c0_4, %c0_5] : memref<4x128xf32, #tpu.memory_space<vmem>>, vector<4x128xf32>
    %cst = arith.constant dense<0.000000e+00> : vector<16x128xf32>
    %4 = tpu.matmul %1, %3, %cst {dimension_numbers = #tpu.dot_dimension_numbers<[1], [0], [0], [1], [0, 0, 1, 1], [], []>} : vector<16x4xf32>, vector<4x128xf32>, vector<16x128xf32> -> vector<16x128xf32>
    %c0_6 = arith.constant 0 : index
    %c0_7 = arith.constant 0 : index
    %5 = vector.load %arg3[%c0_6, %c0_7] : memref<1x128xf32, #tpu.memory_space<vmem>>, vector<1x128xf32>
    %6 = vector.broadcast %5 : vector<1x128xf32> to vector<16x128xf32>
    %7 = arith.addf %4, %6 : vector<16x128xf32>
    %8 = vector.shape_cast %7 : vector<16x128xf32> to vector<2x8x128xf32>
    %9 = tpu.transpose %8, [1, 0, 2] : vector<2x8x128xf32> -> vector<8x2x128xf32>
    %cst_8 = arith.constant 0.000000e+00 : f32
    %10 = vector.broadcast %cst_8 : f32 to vector<2x32xf32>
    %cst_9 = arith.constant 0.000000e+00 : f32
    %11 = vector.broadcast %cst_9 : f32 to vector<2x32xf32>
    %12 = vector.extract_strided_slice %9 {offsets = [0, 0, 0], sizes = [1, 2, 128], strides = [1, 1, 1]} : vector<8x2x128xf32> to vector<1x2x128xf32>
    %13 = vector.shape_cast %12 : vector<1x2x128xf32> to vector<2x128xf32>
    %cst_10 = arith.constant dense<0.000000e+00> : vector<2x128xf32>
    %14 = tpu.matmul %10, %2, %cst_10 {dimension_numbers = #tpu.dot_dimension_numbers<[1], [0], [0], [1], [0, 0, 1, 1], [], []>} : vector<2x32xf32>, vector<32x128xf32>, vector<2x128xf32> -> vector<2x128xf32>
    %15 = arith.addf %13, %14 : vector<2x128xf32>
    %16 = arith.negf %15 : vector<2x128xf32>
    %17 = math.exp %16 : vector<2x128xf32>
    %cst_11 = arith.constant 1.000000e+00 : f32
    %18 = vector.broadcast %cst_11 : f32 to vector<2x128xf32>
    %19 = arith.addf %18, %17 : vector<2x128xf32>
    %20 = arith.divf %18, %19 : vector<2x128xf32>
    %21 = math.tanh %15 : vector<2x128xf32>
    %22 = vector.extract_strided_slice %20 {offsets = [0, 0], sizes = [2, 32], strides = [1, 1]} : vector<2x128xf32> to vector<2x32xf32>
    %23 = vector.extract_strided_slice %20 {offsets = [0, 32], sizes = [2, 32], strides = [1, 1]} : vector<2x128xf32> to vector<2x32xf32>
    %24 = vector.extract_strided_slice %21 {offsets = [0, 64], sizes = [2, 32], strides = [1, 1]} : vector<2x128xf32> to vector<2x32xf32>
    %25 = vector.extract_strided_slice %20 {offsets = [0, 96], sizes = [2, 32], strides = [1, 1]} : vector<2x128xf32> to vector<2x32xf32>
    %26 = arith.mulf %23, %11 : vector<2x32xf32>
    %27 = arith.mulf %22, %24 : vector<2x32xf32>
    %28 = arith.addf %26, %27 : vector<2x32xf32>
    %29 = math.tanh %28 : vector<2x32xf32>
    %30 = arith.mulf %25, %29 : vector<2x32xf32>
    %c0_12 = arith.constant 0 : index
    %c0_13 = arith.constant 0 : index
    %c0_14 = arith.constant 0 : index
    %31 = vector.load %arg10[%c0_12, %c0_13, %c0_14] : memref<8x2x32xf32, #tpu.memory_space<vmem>>, vector<1x2x32xf32>
    %32 = vector.shape_cast %31 : vector<1x2x32xf32> to vector<2x32xf32>
    %33 = vector.shape_cast %30 : vector<2x32xf32> to vector<1x2x32xf32>
    tpu.vector_store %arg10[%c0_12, %c0_13, %c0_14], %33 {strides = array<i32>} : memref<8x2x32xf32, #tpu.memory_space<vmem>>, vector<1x2x32xf32>,
    %34 = vector.extract_strided_slice %9 {offsets = [1, 0, 0], sizes = [1, 2, 128], strides = [1, 1, 1]} : vector<8x2x128xf32> to vector<1x2x128xf32>
    %35 = vector.shape_cast %34 : vector<1x2x128xf32> to vector<2x128xf32>
    %cst_15 = arith.constant dense<0.000000e+00> : vector<2x128xf32>
    %36 = tpu.matmul %30, %2, %cst_15 {dimension_numbers = #tpu.dot_dimension_numbers<[1], [0], [0], [1], [0, 0, 1, 1], [], []>} : vector<2x32xf32>, vector<32x128xf32>, vector<2x128xf32> -> vector<2x128xf32>
    %37 = arith.addf %35, %36 : vector<2x128xf32>
    %38 = arith.negf %37 : vector<2x128xf32>
    %39 = math.exp %38 : vector<2x128xf32>
    %cst_16 = arith.constant 1.000000e+00 : f32
    %40 = vector.broadcast %cst_16 : f32 to vector<2x128xf32>
    %41 = arith.addf %40, %39 : vector<2x128xf32>
    %42 = arith.divf %40, %41 : vector<2x128xf32>
    %43 = math.tanh %37 : vector<2x128xf32>
    %44 = vector.extract_strided_slice %42 {offsets = [0, 0], sizes = [2, 32], strides = [1, 1]} : vector<2x128xf32> to vector<2x32xf32>
    %45 = vector.extract_strided_slice %42 {offsets = [0, 32], sizes = [2, 32], strides = [1, 1]} : vector<2x128xf32> to vector<2x32xf32>
    %46 = vector.extract_strided_slice %43 {offsets = [0, 64], sizes = [2, 32], strides = [1, 1]} : vector<2x128xf32> to vector<2x32xf32>
    %47 = vector.extract_strided_slice %42 {offsets = [0, 96], sizes = [2, 32], strides = [1, 1]} : vector<2x128xf32> to vector<2x32xf32>
    %48 = arith.mulf %45, %28 : vector<2x32xf32>
    %49 = arith.mulf %44, %46 : vector<2x32xf32>
    %50 = arith.addf %48, %49 : vector<2x32xf32>
    %51 = math.tanh %50 : vector<2x32xf32>
    %52 = arith.mulf %47, %51 : vector<2x32xf32>
    %c1 = arith.constant 1 : index
    %c0_17 = arith.constant 0 : index
    %c0_18 = arith.constant 0 : index
    %53 = vector.load %arg10[%c1, %c0_17, %c0_18] : memref<8x2x32xf32, #tpu.memory_space<vmem>>, vector<1x2x32xf32>
    %54 = vector.shape_cast %53 : vector<1x2x32xf32> to vector<2x32xf32>
    %55 = vector.shape_cast %52 : vector<2x32xf32> to vector<1x2x32xf32>
    tpu.vector_store %arg10[%c1, %c0_17, %c0_18], %55 {strides = array<i32>} : memref<8x2x32xf32, #tpu.memory_space<vmem>>, vector<1x2x32xf32>,
    %56 = vector.extract_strided_slice %9 {offsets = [2, 0, 0], sizes = [1, 2, 128], strides = [1, 1, 1]} : vector<8x2x128xf32> to vector<1x2x128xf32>
    %57 = vector.shape_cast %56 : vector<1x2x128xf32> to vector<2x128xf32>
    %cst_19 = arith.constant dense<0.000000e+00> : vector<2x128xf32>
    %58 = tpu.matmul %52, %2, %cst_19 {dimension_numbers = #tpu.dot_dimension_numbers<[1], [0], [0], [1], [0, 0, 1, 1], [], []>} : vector<2x32xf32>, vector<32x128xf32>, vector<2x128xf32> -> vector<2x128xf32>
    %59 = arith.addf %57, %58 : vector<2x128xf32>
    %60 = arith.negf %59 : vector<2x128xf32>
    %61 = math.exp %60 : vector<2x128xf32>
    %cst_20 = arith.constant 1.000000e+00 : f32
    %62 = vector.broadcast %cst_20 : f32 to vector<2x128xf32>
    %63 = arith.addf %62, %61 : vector<2x128xf32>
    %64 = arith.divf %62, %63 : vector<2x128xf32>
    %65 = math.tanh %59 : vector<2x128xf32>
    %66 = vector.extract_strided_slice %64 {offsets = [0, 0], sizes = [2, 32], strides = [1, 1]} : vector<2x128xf32> to vector<2x32xf32>
    %67 = vector.extract_strided_slice %64 {offsets = [0, 32], sizes = [2, 32], strides = [1, 1]} : vector<2x128xf32> to vector<2x32xf32>
    %68 = vector.extract_strided_slice %65 {offsets = [0, 64], sizes = [2, 32], strides = [1, 1]} : vector<2x128xf32> to vector<2x32xf32>
    %69 = vector.extract_strided_slice %64 {offsets = [0, 96], sizes = [2, 32], strides = [1, 1]} : vector<2x128xf32> to vector<2x32xf32>
    %70 = arith.mulf %67, %50 : vector<2x32xf32>
    %71 = arith.mulf %66, %68 : vector<2x32xf32>
    %72 = arith.addf %70, %71 : vector<2x32xf32>
    %73 = math.tanh %72 : vector<2x32xf32>
    %74 = arith.mulf %69, %73 : vector<2x32xf32>
    %c2 = arith.constant 2 : index
    %c0_21 = arith.constant 0 : index
    %c0_22 = arith.constant 0 : index
    %75 = vector.load %arg10[%c2, %c0_21, %c0_22] : memref<8x2x32xf32, #tpu.memory_space<vmem>>, vector<1x2x32xf32>
    %76 = vector.shape_cast %75 : vector<1x2x32xf32> to vector<2x32xf32>
    %77 = vector.shape_cast %74 : vector<2x32xf32> to vector<1x2x32xf32>
    tpu.vector_store %arg10[%c2, %c0_21, %c0_22], %77 {strides = array<i32>} : memref<8x2x32xf32, #tpu.memory_space<vmem>>, vector<1x2x32xf32>,
    %78 = vector.extract_strided_slice %9 {offsets = [3, 0, 0], sizes = [1, 2, 128], strides = [1, 1, 1]} : vector<8x2x128xf32> to vector<1x2x128xf32>
    %79 = vector.shape_cast %78 : vector<1x2x128xf32> to vector<2x128xf32>
    %cst_23 = arith.constant dense<0.000000e+00> : vector<2x128xf32>
    %80 = tpu.matmul %74, %2, %cst_23 {dimension_numbers = #tpu.dot_dimension_numbers<[1], [0], [0], [1], [0, 0, 1, 1], [], []>} : vector<2x32xf32>, vector<32x128xf32>, vector<2x128xf32> -> vector<2x128xf32>
    %81 = arith.addf %79, %80 : vector<2x128xf32>
    %82 = arith.negf %81 : vector<2x128xf32>
    %83 = math.exp %82 : vector<2x128xf32>
    %cst_24 = arith.constant 1.000000e+00 : f32
    %84 = vector.broadcast %cst_24 : f32 to vector<2x128xf32>
    %85 = arith.addf %84, %83 : vector<2x128xf32>
    %86 = arith.divf %84, %85 : vector<2x128xf32>
    %87 = math.tanh %81 : vector<2x128xf32>
    %88 = vector.extract_strided_slice %86 {offsets = [0, 0], sizes = [2, 32], strides = [1, 1]} : vector<2x128xf32> to vector<2x32xf32>
    %89 = vector.extract_strided_slice %86 {offsets = [0, 32], sizes = [2, 32], strides = [1, 1]} : vector<2x128xf32> to vector<2x32xf32>
    %90 = vector.extract_strided_slice %87 {offsets = [0, 64], sizes = [2, 32], strides = [1, 1]} : vector<2x128xf32> to vector<2x32xf32>
    %91 = vector.extract_strided_slice %86 {offsets = [0, 96], sizes = [2, 32], strides = [1, 1]} : vector<2x128xf32> to vector<2x32xf32>
    %92 = arith.mulf %89, %72 : vector<2x32xf32>
    %93 = arith.mulf %88, %90 : vector<2x32xf32>
    %94 = arith.addf %92, %93 : vector<2x32xf32>
    %95 = math.tanh %94 : vector<2x32xf32>
    %96 = arith.mulf %91, %95 : vector<2x32xf32>
    %c3 = arith.constant 3 : index
    %c0_25 = arith.constant 0 : index
    %c0_26 = arith.constant 0 : index
    %97 = vector.load %arg10[%c3, %c0_25, %c0_26] : memref<8x2x32xf32, #tpu.memory_space<vmem>>, vector<1x2x32xf32>
    %98 = vector.shape_cast %97 : vector<1x2x32xf32> to vector<2x32xf32>
    %99 = vector.shape_cast %96 : vector<2x32xf32> to vector<1x2x32xf32>
    tpu.vector_store %arg10[%c3, %c0_25, %c0_26], %99 {strides = array<i32>} : memref<8x2x32xf32, #tpu.memory_space<vmem>>, vector<1x2x32xf32>,
    %100 = vector.extract_strided_slice %9 {offsets = [4, 0, 0], sizes = [1, 2, 128], strides = [1, 1, 1]} : vector<8x2x128xf32> to vector<1x2x128xf32>
    %101 = vector.shape_cast %100 : vector<1x2x128xf32> to vector<2x128xf32>
    %cst_27 = arith.constant dense<0.000000e+00> : vector<2x128xf32>
    %102 = tpu.matmul %96, %2, %cst_27 {dimension_numbers = #tpu.dot_dimension_numbers<[1], [0], [0], [1], [0, 0, 1, 1], [], []>} : vector<2x32xf32>, vector<32x128xf32>, vector<2x128xf32> -> vector<2x128xf32>
    %103 = arith.addf %101, %102 : vector<2x128xf32>
    %104 = arith.negf %103 : vector<2x128xf32>
    %105 = math.exp %104 : vector<2x128xf32>
    %cst_28 = arith.constant 1.000000e+00 : f32
    %106 = vector.broadcast %cst_28 : f32 to vector<2x128xf32>
    %107 = arith.addf %106, %105 : vector<2x128xf32>
    %108 = arith.divf %106, %107 : vector<2x128xf32>
    %109 = math.tanh %103 : vector<2x128xf32>
    %110 = vector.extract_strided_slice %108 {offsets = [0, 0], sizes = [2, 32], strides = [1, 1]} : vector<2x128xf32> to vector<2x32xf32>
    %111 = vector.extract_strided_slice %108 {offsets = [0, 32], sizes = [2, 32], strides = [1, 1]} : vector<2x128xf32> to vector<2x32xf32>
    %112 = vector.extract_strided_slice %109 {offsets = [0, 64], sizes = [2, 32], strides = [1, 1]} : vector<2x128xf32> to vector<2x32xf32>
    %113 = vector.extract_strided_slice %108 {offsets = [0, 96], sizes = [2, 32], strides = [1, 1]} : vector<2x128xf32> to vector<2x32xf32>
    %114 = arith.mulf %111, %94 : vector<2x32xf32>
    %115 = arith.mulf %110, %112 : vector<2x32xf32>
    %116 = arith.addf %114, %115 : vector<2x32xf32>
    %117 = math.tanh %116 : vector<2x32xf32>
    %118 = arith.mulf %113, %117 : vector<2x32xf32>
    %c4 = arith.constant 4 : index
    %c0_29 = arith.constant 0 : index
    %c0_30 = arith.constant 0 : index
    %119 = vector.load %arg10[%c4, %c0_29, %c0_30] : memref<8x2x32xf32, #tpu.memory_space<vmem>>, vector<1x2x32xf32>
    %120 = vector.shape_cast %119 : vector<1x2x32xf32> to vector<2x32xf32>
    %121 = vector.shape_cast %118 : vector<2x32xf32> to vector<1x2x32xf32>
    tpu.vector_store %arg10[%c4, %c0_29, %c0_30], %121 {strides = array<i32>} : memref<8x2x32xf32, #tpu.memory_space<vmem>>, vector<1x2x32xf32>,
    %122 = vector.extract_strided_slice %9 {offsets = [5, 0, 0], sizes = [1, 2, 128], strides = [1, 1, 1]} : vector<8x2x128xf32> to vector<1x2x128xf32>
    %123 = vector.shape_cast %122 : vector<1x2x128xf32> to vector<2x128xf32>
    %cst_31 = arith.constant dense<0.000000e+00> : vector<2x128xf32>
    %124 = tpu.matmul %118, %2, %cst_31 {dimension_numbers = #tpu.dot_dimension_numbers<[1], [0], [0], [1], [0, 0, 1, 1], [], []>} : vector<2x32xf32>, vector<32x128xf32>, vector<2x128xf32> -> vector<2x128xf32>
    %125 = arith.addf %123, %124 : vector<2x128xf32>
    %126 = arith.negf %125 : vector<2x128xf32>
    %127 = math.exp %126 : vector<2x128xf32>
    %cst_32 = arith.constant 1.000000e+00 : f32
    %128 = vector.broadcast %cst_32 : f32 to vector<2x128xf32>
    %129 = arith.addf %128, %127 : vector<2x128xf32>
    %130 = arith.divf %128, %129 : vector<2x128xf32>
    %131 = math.tanh %125 : vector<2x128xf32>
    %132 = vector.extract_strided_slice %130 {offsets = [0, 0], sizes = [2, 32], strides = [1, 1]} : vector<2x128xf32> to vector<2x32xf32>
    %133 = vector.extract_strided_slice %130 {offsets = [0, 32], sizes = [2, 32], strides = [1, 1]} : vector<2x128xf32> to vector<2x32xf32>
    %134 = vector.extract_strided_slice %131 {offsets = [0, 64], sizes = [2, 32], strides = [1, 1]} : vector<2x128xf32> to vector<2x32xf32>
    %135 = vector.extract_strided_slice %130 {offsets = [0, 96], sizes = [2, 32], strides = [1, 1]} : vector<2x128xf32> to vector<2x32xf32>
    %136 = arith.mulf %133, %116 : vector<2x32xf32>
    %137 = arith.mulf %132, %134 : vector<2x32xf32>
    %138 = arith.addf %136, %137 : vector<2x32xf32>
    %139 = math.tanh %138 : vector<2x32xf32>
    %140 = arith.mulf %135, %139 : vector<2x32xf32>
    %c5 = arith.constant 5 : index
    %c0_33 = arith.constant 0 : index
    %c0_34 = arith.constant 0 : index
    %141 = vector.load %arg10[%c5, %c0_33, %c0_34] : memref<8x2x32xf32, #tpu.memory_space<vmem>>, vector<1x2x32xf32>
    %142 = vector.shape_cast %141 : vector<1x2x32xf32> to vector<2x32xf32>
    %143 = vector.shape_cast %140 : vector<2x32xf32> to vector<1x2x32xf32>
    tpu.vector_store %arg10[%c5, %c0_33, %c0_34], %143 {strides = array<i32>} : memref<8x2x32xf32, #tpu.memory_space<vmem>>, vector<1x2x32xf32>,
    %144 = vector.extract_strided_slice %9 {offsets = [6, 0, 0], sizes = [1, 2, 128], strides = [1, 1, 1]} : vector<8x2x128xf32> to vector<1x2x128xf32>
    %145 = vector.shape_cast %144 : vector<1x2x128xf32> to vector<2x128xf32>
    %cst_35 = arith.constant dense<0.000000e+00> : vector<2x128xf32>
    %146 = tpu.matmul %140, %2, %cst_35 {dimension_numbers = #tpu.dot_dimension_numbers<[1], [0], [0], [1], [0, 0, 1, 1], [], []>} : vector<2x32xf32>, vector<32x128xf32>, vector<2x128xf32> -> vector<2x128xf32>
    %147 = arith.addf %145, %146 : vector<2x128xf32>
    %148 = arith.negf %147 : vector<2x128xf32>
    %149 = math.exp %148 : vector<2x128xf32>
    %cst_36 = arith.constant 1.000000e+00 : f32
    %150 = vector.broadcast %cst_36 : f32 to vector<2x128xf32>
    %151 = arith.addf %150, %149 : vector<2x128xf32>
    %152 = arith.divf %150, %151 : vector<2x128xf32>
    %153 = math.tanh %147 : vector<2x128xf32>
    %154 = vector.extract_strided_slice %152 {offsets = [0, 0], sizes = [2, 32], strides = [1, 1]} : vector<2x128xf32> to vector<2x32xf32>
    %155 = vector.extract_strided_slice %152 {offsets = [0, 32], sizes = [2, 32], strides = [1, 1]} : vector<2x128xf32> to vector<2x32xf32>
    %156 = vector.extract_strided_slice %153 {offsets = [0, 64], sizes = [2, 32], strides = [1, 1]} : vector<2x128xf32> to vector<2x32xf32>
    %157 = vector.extract_strided_slice %152 {offsets = [0, 96], sizes = [2, 32], strides = [1, 1]} : vector<2x128xf32> to vector<2x32xf32>
    %158 = arith.mulf %155, %138 : vector<2x32xf32>
    %159 = arith.mulf %154, %156 : vector<2x32xf32>
    %160 = arith.addf %158, %159 : vector<2x32xf32>
    %161 = math.tanh %160 : vector<2x32xf32>
    %162 = arith.mulf %157, %161 : vector<2x32xf32>
    %c6 = arith.constant 6 : index
    %c0_37 = arith.constant 0 : index
    %c0_38 = arith.constant 0 : index
    %163 = vector.load %arg10[%c6, %c0_37, %c0_38] : memref<8x2x32xf32, #tpu.memory_space<vmem>>, vector<1x2x32xf32>
    %164 = vector.shape_cast %163 : vector<1x2x32xf32> to vector<2x32xf32>
    %165 = vector.shape_cast %162 : vector<2x32xf32> to vector<1x2x32xf32>
    tpu.vector_store %arg10[%c6, %c0_37, %c0_38], %165 {strides = array<i32>} : memref<8x2x32xf32, #tpu.memory_space<vmem>>, vector<1x2x32xf32>,
    %166 = vector.extract_strided_slice %9 {offsets = [7, 0, 0], sizes = [1, 2, 128], strides = [1, 1, 1]} : vector<8x2x128xf32> to vector<1x2x128xf32>
    %167 = vector.shape_cast %166 : vector<1x2x128xf32> to vector<2x128xf32>
    %cst_39 = arith.constant dense<0.000000e+00> : vector<2x128xf32>
    %168 = tpu.matmul %162, %2, %cst_39 {dimension_numbers = #tpu.dot_dimension_numbers<[1], [0], [0], [1], [0, 0, 1, 1], [], []>} : vector<2x32xf32>, vector<32x128xf32>, vector<2x128xf32> -> vector<2x128xf32>
    %169 = arith.addf %167, %168 : vector<2x128xf32>
    %170 = arith.negf %169 : vector<2x128xf32>
    %171 = math.exp %170 : vector<2x128xf32>
    %cst_40 = arith.constant 1.000000e+00 : f32
    %172 = vector.broadcast %cst_40 : f32 to vector<2x128xf32>
    %173 = arith.addf %172, %171 : vector<2x128xf32>
    %174 = arith.divf %172, %173 : vector<2x128xf32>
    %175 = math.tanh %169 : vector<2x128xf32>
    %176 = vector.extract_strided_slice %174 {offsets = [0, 0], sizes = [2, 32], strides = [1, 1]} : vector<2x128xf32> to vector<2x32xf32>
    %177 = vector.extract_strided_slice %174 {offsets = [0, 32], sizes = [2, 32], strides = [1, 1]} : vector<2x128xf32> to vector<2x32xf32>
    %178 = vector.extract_strided_slice %175 {offsets = [0, 64], sizes = [2, 32], strides = [1, 1]} : vector<2x128xf32> to vector<2x32xf32>
    %179 = vector.extract_strided_slice %174 {offsets = [0, 96], sizes = [2, 32], strides = [1, 1]} : vector<2x128xf32> to vector<2x32xf32>
    %180 = arith.mulf %177, %160 : vector<2x32xf32>
    %181 = arith.mulf %176, %178 : vector<2x32xf32>
    %182 = arith.addf %180, %181 : vector<2x32xf32>
    %183 = math.tanh %182 : vector<2x32xf32>
    %184 = arith.mulf %179, %183 : vector<2x32xf32>
    %c7 = arith.constant 7 : index
    %c0_41 = arith.constant 0 : index
    %c0_42 = arith.constant 0 : index
    %185 = vector.load %arg10[%c7, %c0_41, %c0_42] : memref<8x2x32xf32, #tpu.memory_space<vmem>>, vector<1x2x32xf32>
    %186 = vector.shape_cast %185 : vector<1x2x32xf32> to vector<2x32xf32>
    %187 = vector.shape_cast %184 : vector<2x32xf32> to vector<1x2x32xf32>
    tpu.vector_store %arg10[%c7, %c0_41, %c0_42], %187 {strides = array<i32>} : memref<8x2x32xf32, #tpu.memory_space<vmem>>, vector<1x2x32xf32>,
    %c0_43 = arith.constant 0 : index
    %c0_44 = arith.constant 0 : index
    %c0_45 = arith.constant 0 : index
    %188 = vector.load %arg10[%c0_43, %c0_44, %c0_45] : memref<8x2x32xf32, #tpu.memory_space<vmem>>, vector<8x2x32xf32>
    %189 = vector.shape_cast %188 : vector<8x2x32xf32> to vector<16x32xf32>
    %c0_46 = arith.constant 0 : index
    %c0_47 = arith.constant 0 : index
    %190 = vector.load %arg5[%c0_46, %c0_47] : memref<32x128xf32, #tpu.memory_space<vmem>>, vector<32x128xf32>
    %c0_48 = arith.constant 0 : index
    %c0_49 = arith.constant 0 : index
    %191 = vector.load %arg4[%c0_48, %c0_49] : memref<32x128xf32, #tpu.memory_space<vmem>>, vector<32x128xf32>
    %cst_50 = arith.constant dense<0.000000e+00> : vector<16x128xf32>
    %192 = tpu.matmul %189, %191, %cst_50 {dimension_numbers = #tpu.dot_dimension_numbers<[1], [0], [0], [1], [0, 0, 1, 1], [], []>} : vector<16x32xf32>, vector<32x128xf32>, vector<16x128xf32> -> vector<16x128xf32>
    %c0_51 = arith.constant 0 : index
    %c0_52 = arith.constant 0 : index
    %193 = vector.load %arg6[%c0_51, %c0_52] : memref<1x128xf32, #tpu.memory_space<vmem>>, vector<1x128xf32>
    %194 = vector.broadcast %193 : vector<1x128xf32> to vector<16x128xf32>
    %195 = arith.addf %192, %194 : vector<16x128xf32>
    %196 = vector.shape_cast %195 : vector<16x128xf32> to vector<8x2x128xf32>
    %cst_53 = arith.constant 0.000000e+00 : f32
    %197 = vector.broadcast %cst_53 : f32 to vector<2x32xf32>
    %cst_54 = arith.constant 0.000000e+00 : f32
    %198 = vector.broadcast %cst_54 : f32 to vector<2x32xf32>
    %199 = vector.extract_strided_slice %196 {offsets = [0, 0, 0], sizes = [1, 2, 128], strides = [1, 1, 1]} : vector<8x2x128xf32> to vector<1x2x128xf32>
    %200 = vector.shape_cast %199 : vector<1x2x128xf32> to vector<2x128xf32>
    %cst_55 = arith.constant dense<0.000000e+00> : vector<2x128xf32>
    %201 = tpu.matmul %197, %190, %cst_55 {dimension_numbers = #tpu.dot_dimension_numbers<[1], [0], [0], [1], [0, 0, 1, 1], [], []>} : vector<2x32xf32>, vector<32x128xf32>, vector<2x128xf32> -> vector<2x128xf32>
    %202 = arith.addf %200, %201 : vector<2x128xf32>
    %203 = arith.negf %202 : vector<2x128xf32>
    %204 = math.exp %203 : vector<2x128xf32>
    %cst_56 = arith.constant 1.000000e+00 : f32
    %205 = vector.broadcast %cst_56 : f32 to vector<2x128xf32>
    %206 = arith.addf %205, %204 : vector<2x128xf32>
    %207 = arith.divf %205, %206 : vector<2x128xf32>
    %208 = math.tanh %202 : vector<2x128xf32>
    %209 = vector.extract_strided_slice %207 {offsets = [0, 0], sizes = [2, 32], strides = [1, 1]} : vector<2x128xf32> to vector<2x32xf32>
    %210 = vector.extract_strided_slice %207 {offsets = [0, 32], sizes = [2, 32], strides = [1, 1]} : vector<2x128xf32> to vector<2x32xf32>
    %211 = vector.extract_strided_slice %208 {offsets = [0, 64], sizes = [2, 32], strides = [1, 1]} : vector<2x128xf32> to vector<2x32xf32>
    %212 = vector.extract_strided_slice %207 {offsets = [0, 96], sizes = [2, 32], strides = [1, 1]} : vector<2x128xf32> to vector<2x32xf32>
    %213 = arith.mulf %210, %198 : vector<2x32xf32>
    %214 = arith.mulf %209, %211 : vector<2x32xf32>
    %215 = arith.addf %213, %214 : vector<2x32xf32>
    %216 = math.tanh %215 : vector<2x32xf32>
    %217 = arith.mulf %212, %216 : vector<2x32xf32>
    %218 = vector.extract_strided_slice %196 {offsets = [1, 0, 0], sizes = [1, 2, 128], strides = [1, 1, 1]} : vector<8x2x128xf32> to vector<1x2x128xf32>
    %219 = vector.shape_cast %218 : vector<1x2x128xf32> to vector<2x128xf32>
    %cst_57 = arith.constant dense<0.000000e+00> : vector<2x128xf32>
    %220 = tpu.matmul %217, %190, %cst_57 {dimension_numbers = #tpu.dot_dimension_numbers<[1], [0], [0], [1], [0, 0, 1, 1], [], []>} : vector<2x32xf32>, vector<32x128xf32>, vector<2x128xf32> -> vector<2x128xf32>
    %221 = arith.addf %219, %220 : vector<2x128xf32>
    %222 = arith.negf %221 : vector<2x128xf32>
    %223 = math.exp %222 : vector<2x128xf32>
    %cst_58 = arith.constant 1.000000e+00 : f32
    %224 = vector.broadcast %cst_58 : f32 to vector<2x128xf32>
    %225 = arith.addf %224, %223 : vector<2x128xf32>
    %226 = arith.divf %224, %225 : vector<2x128xf32>
    %227 = math.tanh %221 : vector<2x128xf32>
    %228 = vector.extract_strided_slice %226 {offsets = [0, 0], sizes = [2, 32], strides = [1, 1]} : vector<2x128xf32> to vector<2x32xf32>
    %229 = vector.extract_strided_slice %226 {offsets = [0, 32], sizes = [2, 32], strides = [1, 1]} : vector<2x128xf32> to vector<2x32xf32>
    %230 = vector.extract_strided_slice %227 {offsets = [0, 64], sizes = [2, 32], strides = [1, 1]} : vector<2x128xf32> to vector<2x32xf32>
    %231 = vector.extract_strided_slice %226 {offsets = [0, 96], sizes = [2, 32], strides = [1, 1]} : vector<2x128xf32> to vector<2x32xf32>
    %232 = arith.mulf %229, %215 : vector<2x32xf32>
    %233 = arith.mulf %228, %230 : vector<2x32xf32>
    %234 = arith.addf %232, %233 : vector<2x32xf32>
    %235 = math.tanh %234 : vector<2x32xf32>
    %236 = arith.mulf %231, %235 : vector<2x32xf32>
    %237 = vector.extract_strided_slice %196 {offsets = [2, 0, 0], sizes = [1, 2, 128], strides = [1, 1, 1]} : vector<8x2x128xf32> to vector<1x2x128xf32>
    %238 = vector.shape_cast %237 : vector<1x2x128xf32> to vector<2x128xf32>
    %cst_59 = arith.constant dense<0.000000e+00> : vector<2x128xf32>
    %239 = tpu.matmul %236, %190, %cst_59 {dimension_numbers = #tpu.dot_dimension_numbers<[1], [0], [0], [1], [0, 0, 1, 1], [], []>} : vector<2x32xf32>, vector<32x128xf32>, vector<2x128xf32> -> vector<2x128xf32>
    %240 = arith.addf %238, %239 : vector<2x128xf32>
    %241 = arith.negf %240 : vector<2x128xf32>
    %242 = math.exp %241 : vector<2x128xf32>
    %cst_60 = arith.constant 1.000000e+00 : f32
    %243 = vector.broadcast %cst_60 : f32 to vector<2x128xf32>
    %244 = arith.addf %243, %242 : vector<2x128xf32>
    %245 = arith.divf %243, %244 : vector<2x128xf32>
    %246 = math.tanh %240 : vector<2x128xf32>
    %247 = vector.extract_strided_slice %245 {offsets = [0, 0], sizes = [2, 32], strides = [1, 1]} : vector<2x128xf32> to vector<2x32xf32>
    %248 = vector.extract_strided_slice %245 {offsets = [0, 32], sizes = [2, 32], strides = [1, 1]} : vector<2x128xf32> to vector<2x32xf32>
    %249 = vector.extract_strided_slice %246 {offsets = [0, 64], sizes = [2, 32], strides = [1, 1]} : vector<2x128xf32> to vector<2x32xf32>
    %250 = vector.extract_strided_slice %245 {offsets = [0, 96], sizes = [2, 32], strides = [1, 1]} : vector<2x128xf32> to vector<2x32xf32>
    %251 = arith.mulf %248, %234 : vector<2x32xf32>
    %252 = arith.mulf %247, %249 : vector<2x32xf32>
    %253 = arith.addf %251, %252 : vector<2x32xf32>
    %254 = math.tanh %253 : vector<2x32xf32>
    %255 = arith.mulf %250, %254 : vector<2x32xf32>
    %256 = vector.extract_strided_slice %196 {offsets = [3, 0, 0], sizes = [1, 2, 128], strides = [1, 1, 1]} : vector<8x2x128xf32> to vector<1x2x128xf32>
    %257 = vector.shape_cast %256 : vector<1x2x128xf32> to vector<2x128xf32>
    %cst_61 = arith.constant dense<0.000000e+00> : vector<2x128xf32>
    %258 = tpu.matmul %255, %190, %cst_61 {dimension_numbers = #tpu.dot_dimension_numbers<[1], [0], [0], [1], [0, 0, 1, 1], [], []>} : vector<2x32xf32>, vector<32x128xf32>, vector<2x128xf32> -> vector<2x128xf32>
    %259 = arith.addf %257, %258 : vector<2x128xf32>
    %260 = arith.negf %259 : vector<2x128xf32>
    %261 = math.exp %260 : vector<2x128xf32>
    %cst_62 = arith.constant 1.000000e+00 : f32
    %262 = vector.broadcast %cst_62 : f32 to vector<2x128xf32>
    %263 = arith.addf %262, %261 : vector<2x128xf32>
    %264 = arith.divf %262, %263 : vector<2x128xf32>
    %265 = math.tanh %259 : vector<2x128xf32>
    %266 = vector.extract_strided_slice %264 {offsets = [0, 0], sizes = [2, 32], strides = [1, 1]} : vector<2x128xf32> to vector<2x32xf32>
    %267 = vector.extract_strided_slice %264 {offsets = [0, 32], sizes = [2, 32], strides = [1, 1]} : vector<2x128xf32> to vector<2x32xf32>
    %268 = vector.extract_strided_slice %265 {offsets = [0, 64], sizes = [2, 32], strides = [1, 1]} : vector<2x128xf32> to vector<2x32xf32>
    %269 = vector.extract_strided_slice %264 {offsets = [0, 96], sizes = [2, 32], strides = [1, 1]} : vector<2x128xf32> to vector<2x32xf32>
    %270 = arith.mulf %267, %253 : vector<2x32xf32>
    %271 = arith.mulf %266, %268 : vector<2x32xf32>
    %272 = arith.addf %270, %271 : vector<2x32xf32>
    %273 = math.tanh %272 : vector<2x32xf32>
    %274 = arith.mulf %269, %273 : vector<2x32xf32>
    %275 = vector.extract_strided_slice %196 {offsets = [4, 0, 0], sizes = [1, 2, 128], strides = [1, 1, 1]} : vector<8x2x128xf32> to vector<1x2x128xf32>
    %276 = vector.shape_cast %275 : vector<1x2x128xf32> to vector<2x128xf32>
    %cst_63 = arith.constant dense<0.000000e+00> : vector<2x128xf32>
    %277 = tpu.matmul %274, %190, %cst_63 {dimension_numbers = #tpu.dot_dimension_numbers<[1], [0], [0], [1], [0, 0, 1, 1], [], []>} : vector<2x32xf32>, vector<32x128xf32>, vector<2x128xf32> -> vector<2x128xf32>
    %278 = arith.addf %276, %277 : vector<2x128xf32>
    %279 = arith.negf %278 : vector<2x128xf32>
    %280 = math.exp %279 : vector<2x128xf32>
    %cst_64 = arith.constant 1.000000e+00 : f32
    %281 = vector.broadcast %cst_64 : f32 to vector<2x128xf32>
    %282 = arith.addf %281, %280 : vector<2x128xf32>
    %283 = arith.divf %281, %282 : vector<2x128xf32>
    %284 = math.tanh %278 : vector<2x128xf32>
    %285 = vector.extract_strided_slice %283 {offsets = [0, 0], sizes = [2, 32], strides = [1, 1]} : vector<2x128xf32> to vector<2x32xf32>
    %286 = vector.extract_strided_slice %283 {offsets = [0, 32], sizes = [2, 32], strides = [1, 1]} : vector<2x128xf32> to vector<2x32xf32>
    %287 = vector.extract_strided_slice %284 {offsets = [0, 64], sizes = [2, 32], strides = [1, 1]} : vector<2x128xf32> to vector<2x32xf32>
    %288 = vector.extract_strided_slice %283 {offsets = [0, 96], sizes = [2, 32], strides = [1, 1]} : vector<2x128xf32> to vector<2x32xf32>
    %289 = arith.mulf %286, %272 : vector<2x32xf32>
    %290 = arith.mulf %285, %287 : vector<2x32xf32>
    %291 = arith.addf %289, %290 : vector<2x32xf32>
    %292 = math.tanh %291 : vector<2x32xf32>
    %293 = arith.mulf %288, %292 : vector<2x32xf32>
    %294 = vector.extract_strided_slice %196 {offsets = [5, 0, 0], sizes = [1, 2, 128], strides = [1, 1, 1]} : vector<8x2x128xf32> to vector<1x2x128xf32>
    %295 = vector.shape_cast %294 : vector<1x2x128xf32> to vector<2x128xf32>
    %cst_65 = arith.constant dense<0.000000e+00> : vector<2x128xf32>
    %296 = tpu.matmul %293, %190, %cst_65 {dimension_numbers = #tpu.dot_dimension_numbers<[1], [0], [0], [1], [0, 0, 1, 1], [], []>} : vector<2x32xf32>, vector<32x128xf32>, vector<2x128xf32> -> vector<2x128xf32>
    %297 = arith.addf %295, %296 : vector<2x128xf32>
    %298 = arith.negf %297 : vector<2x128xf32>
    %299 = math.exp %298 : vector<2x128xf32>
    %cst_66 = arith.constant 1.000000e+00 : f32
    %300 = vector.broadcast %cst_66 : f32 to vector<2x128xf32>
    %301 = arith.addf %300, %299 : vector<2x128xf32>
    %302 = arith.divf %300, %301 : vector<2x128xf32>
    %303 = math.tanh %297 : vector<2x128xf32>
    %304 = vector.extract_strided_slice %302 {offsets = [0, 0], sizes = [2, 32], strides = [1, 1]} : vector<2x128xf32> to vector<2x32xf32>
    %305 = vector.extract_strided_slice %302 {offsets = [0, 32], sizes = [2, 32], strides = [1, 1]} : vector<2x128xf32> to vector<2x32xf32>
    %306 = vector.extract_strided_slice %303 {offsets = [0, 64], sizes = [2, 32], strides = [1, 1]} : vector<2x128xf32> to vector<2x32xf32>
    %307 = vector.extract_strided_slice %302 {offsets = [0, 96], sizes = [2, 32], strides = [1, 1]} : vector<2x128xf32> to vector<2x32xf32>
    %308 = arith.mulf %305, %291 : vector<2x32xf32>
    %309 = arith.mulf %304, %306 : vector<2x32xf32>
    %310 = arith.addf %308, %309 : vector<2x32xf32>
    %311 = math.tanh %310 : vector<2x32xf32>
    %312 = arith.mulf %307, %311 : vector<2x32xf32>
    %313 = vector.extract_strided_slice %196 {offsets = [6, 0, 0], sizes = [1, 2, 128], strides = [1, 1, 1]} : vector<8x2x128xf32> to vector<1x2x128xf32>
    %314 = vector.shape_cast %313 : vector<1x2x128xf32> to vector<2x128xf32>
    %cst_67 = arith.constant dense<0.000000e+00> : vector<2x128xf32>
    %315 = tpu.matmul %312, %190, %cst_67 {dimension_numbers = #tpu.dot_dimension_numbers<[1], [0], [0], [1], [0, 0, 1, 1], [], []>} : vector<2x32xf32>, vector<32x128xf32>, vector<2x128xf32> -> vector<2x128xf32>
    %316 = arith.addf %314, %315 : vector<2x128xf32>
    %317 = arith.negf %316 : vector<2x128xf32>
    %318 = math.exp %317 : vector<2x128xf32>
    %cst_68 = arith.constant 1.000000e+00 : f32
    %319 = vector.broadcast %cst_68 : f32 to vector<2x128xf32>
    %320 = arith.addf %319, %318 : vector<2x128xf32>
    %321 = arith.divf %319, %320 : vector<2x128xf32>
    %322 = math.tanh %316 : vector<2x128xf32>
    %323 = vector.extract_strided_slice %321 {offsets = [0, 0], sizes = [2, 32], strides = [1, 1]} : vector<2x128xf32> to vector<2x32xf32>
    %324 = vector.extract_strided_slice %321 {offsets = [0, 32], sizes = [2, 32], strides = [1, 1]} : vector<2x128xf32> to vector<2x32xf32>
    %325 = vector.extract_strided_slice %322 {offsets = [0, 64], sizes = [2, 32], strides = [1, 1]} : vector<2x128xf32> to vector<2x32xf32>
    %326 = vector.extract_strided_slice %321 {offsets = [0, 96], sizes = [2, 32], strides = [1, 1]} : vector<2x128xf32> to vector<2x32xf32>
    %327 = arith.mulf %324, %310 : vector<2x32xf32>
    %328 = arith.mulf %323, %325 : vector<2x32xf32>
    %329 = arith.addf %327, %328 : vector<2x32xf32>
    %330 = math.tanh %329 : vector<2x32xf32>
    %331 = arith.mulf %326, %330 : vector<2x32xf32>
    %332 = vector.extract_strided_slice %196 {offsets = [7, 0, 0], sizes = [1, 2, 128], strides = [1, 1, 1]} : vector<8x2x128xf32> to vector<1x2x128xf32>
    %333 = vector.shape_cast %332 : vector<1x2x128xf32> to vector<2x128xf32>
    %cst_69 = arith.constant dense<0.000000e+00> : vector<2x128xf32>
    %334 = tpu.matmul %331, %190, %cst_69 {dimension_numbers = #tpu.dot_dimension_numbers<[1], [0], [0], [1], [0, 0, 1, 1], [], []>} : vector<2x32xf32>, vector<32x128xf32>, vector<2x128xf32> -> vector<2x128xf32>
    %335 = arith.addf %333, %334 : vector<2x128xf32>
    %336 = arith.negf %335 : vector<2x128xf32>
    %337 = math.exp %336 : vector<2x128xf32>
    %cst_70 = arith.constant 1.000000e+00 : f32
    %338 = vector.broadcast %cst_70 : f32 to vector<2x128xf32>
    %339 = arith.addf %338, %337 : vector<2x128xf32>
    %340 = arith.divf %338, %339 : vector<2x128xf32>
    %341 = math.tanh %335 : vector<2x128xf32>
    %342 = vector.extract_strided_slice %340 {offsets = [0, 0], sizes = [2, 32], strides = [1, 1]} : vector<2x128xf32> to vector<2x32xf32>
    %343 = vector.extract_strided_slice %340 {offsets = [0, 32], sizes = [2, 32], strides = [1, 1]} : vector<2x128xf32> to vector<2x32xf32>
    %344 = vector.extract_strided_slice %341 {offsets = [0, 64], sizes = [2, 32], strides = [1, 1]} : vector<2x128xf32> to vector<2x32xf32>
    %345 = vector.extract_strided_slice %340 {offsets = [0, 96], sizes = [2, 32], strides = [1, 1]} : vector<2x128xf32> to vector<2x32xf32>
    %346 = arith.mulf %343, %329 : vector<2x32xf32>
    %347 = arith.mulf %342, %344 : vector<2x32xf32>
    %348 = arith.addf %346, %347 : vector<2x32xf32>
    %349 = math.tanh %348 : vector<2x32xf32>
    %350 = arith.mulf %345, %349 : vector<2x32xf32>
    %c0_71 = arith.constant 0 : index
    %c0_72 = arith.constant 0 : index
    %351 = vector.load %arg7[%c0_71, %c0_72] : memref<32x4xf32, #tpu.memory_space<vmem>>, vector<32x4xf32>
    %cst_73 = arith.constant dense<0.000000e+00> : vector<2x4xf32>
    %352 = tpu.matmul %350, %351, %cst_73 {dimension_numbers = #tpu.dot_dimension_numbers<[1], [0], [0], [1], [0, 0, 1, 1], [], []>} : vector<2x32xf32>, vector<32x4xf32>, vector<2x4xf32> -> vector<2x4xf32>
    %c0_74 = arith.constant 0 : index
    %c0_75 = arith.constant 0 : index
    %353 = vector.load %arg8[%c0_74, %c0_75] : memref<1x4xf32, #tpu.memory_space<vmem>>, vector<1x4xf32>
    %354 = vector.broadcast %353 : vector<1x4xf32> to vector<2x4xf32>
    %355 = arith.addf %352, %354 : vector<2x4xf32>
    %c0_76 = arith.constant 0 : index
    %c0_77 = arith.constant 0 : index
    %356 = vector.load %arg9[%c0_76, %c0_77] : memref<2x4xf32, #tpu.memory_space<vmem>>, vector<2x4xf32>
    tpu.vector_store %arg9[%c0_76, %c0_77], %355 {strides = array<i32>} : memref<2x4xf32, #tpu.memory_space<vmem>>, vector<2x4xf32>,
    return
  }
}

</mosaic_0001>

<llo_original>
// kernel: tpu_custom_call.1
$region0: #{tpu_custom_call.1}
  #allocation0 [shape = 'u32[]', space=smem, size = 0x4, offset = 0x4, fixed_abs, tag = 'smem constant byte address 0x4 - core index']
  #allocation1 [shape = 'u32[72,128]{1,0:T(1,128)}', space=vmem, size = 0x9000, scoped, tag = 'internal scratch']
  #allocation2 [shape = 'f32[8,2,32]{2,1,0:T(2,128)}', space=vmem, size = 0x2000, scoped, tag = 'scratch operand']
  %s0 = inlined_call_operand.vmem [shape: f32[2,8,4], index: 0, kind: input, shape index: {}]
  %s1 = inlined_call_operand.vmem [shape: f32[4,128], index: 1, kind: input, shape index: {}]
  %s2 = inlined_call_operand.vmem [shape: f32[32,128], index: 2, kind: input, shape index: {}]
  %s3 = inlined_call_operand.vmem [shape: f32[1,128], index: 3, kind: input, shape index: {}]
  %s4 = inlined_call_operand.hbm [shape: f32[32,128], index: 4, kind: input, shape index: {}]
  %s5 = inlined_call_operand.hbm [shape: f32[32,128], index: 5, kind: input, shape index: {}]
  %s6 = inlined_call_operand.vmem [shape: f32[1,128], index: 6, kind: input, shape index: {}]
  %s7 = inlined_call_operand.vmem [shape: f32[32,4], index: 7, kind: input, shape index: {}]
  %s8 = inlined_call_operand.vmem [shape: f32[1,4], index: 8, kind: input, shape index: {}]
  %s9 = inlined_call_operand.hbm [shape: f32[2,4], index: 9, kind: output, shape index: {}]
  %s10 = sld [smem:[#allocation0]]
  $region54: #{tpu_custom_call.1} parent=0
    _
  %s12 = ssub.s32 1, %s10
  %s13 = scalar_select 0, %s12, %s10
  $region1: #{tpu_custom_call.1} parent=0
    #allocation3 [shape = 'u8[16384]{0}', space=vmem, size = 0x4000, scoped, tag = 'input window, operand 4, single buffered']
    #allocation4 [shape = 's32[1]{0}', space=sflag, size = 0x4, scoped, tag = 'scoped memory for tpu_custom_call.1']
    #allocation5 [shape = 's32[1]{0}', space=sflag, size = 0x4, scoped, tag = 'scoped memory for tpu_custom_call.1']
    #allocation6 [shape = 'u8[16384]{0}', space=vmem, size = 0x4000, scoped, tag = 'input window, operand 5, single buffered']
    #allocation7 [shape = 's32[1]{0}', space=sflag, size = 0x4, scoped, tag = 'scoped memory for tpu_custom_call.1']
    #allocation8 [shape = 'u8[1024]{0}', space=vmem, size = 0x400, scoped, tag = 'output window, operand 0, single buffered']
    %14 = vsyncpa [#allocation4], 0
    %15 = vsyncpa [#allocation7], 0
    %16 = vsyncpa [#allocation5], 0
    // Predicated region
    $region2: #{tpu_custom_call.1} parent=1 // pred_check
      _
    $region3: #{tpu_custom_call.1} parent=1 // pred_check_branch
      %18 = sbr.rel (0) target = $region5
    $region4: #{tpu_custom_call.1} parent=1 // pred_region
      _
    $region5: #{tpu_custom_call.1} parent=1 // pred_fallthru
      _
    // Predicated region
    $region6: #{tpu_custom_call.1} parent=1 // pred_check
      _
    $region7: #{tpu_custom_call.1} parent=1 // pred_check_branch
      %20 = sbr.rel (0) target = $region9
    $region8: #{tpu_custom_call.1} parent=1 // pred_region
      _
    $region9: #{tpu_custom_call.1} parent=1 // pred_fallthru
      _
    // Predicated region
    $region10: #{tpu_custom_call.1} parent=1 // pred_check
      _
    $region11: #{tpu_custom_call.1} parent=1 // pred_check_branch
      %22 = sbr.rel (0) target = $region13
    $region12: #{tpu_custom_call.1} parent=1 // pred_region
      _
    $region13: #{tpu_custom_call.1} parent=1 // pred_fallthru
      _
    // Predicated region
    $region14: #{tpu_custom_call.1} parent=1 // pred_check
      _
    $region15: #{tpu_custom_call.1} parent=1 // pred_check_branch
      %24 = sbr.rel (0) target = $region17
    $region16: #{tpu_custom_call.1} parent=1 // pred_region
      _
    $region17: #{tpu_custom_call.1} parent=1 // pred_fallthru
      _
    // Predicated region
    $region18: #{tpu_custom_call.1} parent=1 // pred_check
      _
    $region19: #{tpu_custom_call.1} parent=1 // pred_check_branch
      %26 = sbr.rel (0) target = $region21
    $region20: #{tpu_custom_call.1} parent=1 // pred_region
      %28 = vsyncadd [#allocation4], 0
      %s29 = sshll.u32 %s4, 4
      %s30 = int_to_ptr.hbm [resolvable:$true] %s29
      %s31 = sshll.u32 [#allocation3], 4
      %s32 = int_to_ptr.vmem [resolvable:$true] %s31
      %37 = dma.hbm_to_vmem [thread:$0]  %s30, 512, %s32, [#allocation4], 128, 128, 8
    $region21: #{tpu_custom_call.1} parent=1 // pred_fallthru
      _
    // Predicated region
    $region22: #{tpu_custom_call.1} parent=1 // pred_check
      _
    $region23: #{tpu_custom_call.1} parent=1 // pred_check_branch
      %39 = sbr.rel (0) target = $region25
    $region24: #{tpu_custom_call.1} parent=1 // pred_region
      %41 = vsyncadd [#allocation7], 0
      %s42 = sshll.u32 %s5, 4
      %s43 = int_to_ptr.hbm [resolvable:$true] %s42
      %s44 = sshll.u32 [#allocation6], 4
      %s45 = int_to_ptr.vmem [resolvable:$true] %s44
      %50 = dma.hbm_to_vmem [thread:$0]  %s43, 512, %s45, [#allocation7], 128, 128, 8
    $region25: #{tpu_custom_call.1} parent=1 // pred_fallthru
      _
    // Predicated region
    $region26: #{tpu_custom_call.1} parent=1 // pred_check
      _
    $region27: #{tpu_custom_call.1} parent=1 // pred_check_branch
      %52 = sbr.rel (0) target = $region29
    $region28: #{tpu_custom_call.1} parent=1 // pred_region
      _
    $region29: #{tpu_custom_call.1} parent=1 // pred_fallthru
      _
    // Predicated region
    $region30: #{tpu_custom_call.1} parent=1 // pred_check
      _
    $region31: #{tpu_custom_call.1} parent=1 // pred_check_branch
      %54 = sbr.rel (0) target = $region33
    $region32: #{tpu_custom_call.1} parent=1 // pred_region
      _
    $region33: #{tpu_custom_call.1} parent=1 // pred_fallthru
      _
    // Predicated region
    $region34: #{tpu_custom_call.1} parent=1 // pred_check
      _
    $region35: #{tpu_custom_call.1} parent=1 // pred_check_branch
      %56 = sbr.rel (0) target = $region37
    $region36: #{tpu_custom_call.1} parent=1 // pred_region
      _
    $region37: #{tpu_custom_call.1} parent=1 // pred_fallthru
      _
    // Predicated region
    $region38: #{tpu_custom_call.1} parent=1 // pred_check
      _
    $region39: #{tpu_custom_call.1} parent=1 // pred_check_branch
      %58 = sbr.rel (0) target = $region41
    $region40: #{tpu_custom_call.1} parent=1 // pred_region
      %60 = dma.done [#allocation4], 512
    $region41: #{tpu_custom_call.1} parent=1 // pred_fallthru
      _
    // Predicated region
    $region42: #{tpu_custom_call.1} parent=1 // pred_check
      _
    $region43: #{tpu_custom_call.1} parent=1 // pred_check_branch
      %62 = sbr.rel (0) target = $region45
    $region44: #{tpu_custom_call.1} parent=1 // pred_region
      %64 = dma.done [#allocation7], 512
    $region45: #{tpu_custom_call.1} parent=1 // pred_fallthru
      _
    %v65 = vld [vmem:[%s0] sm:$0xff]
    %v66 = vld [vmem:[%s0 + $0x8] sm:$0xff]
    %v67 = vld [vmem:[%s2] sm:$0xff]
    %v68 = vld [vmem:[%s2 + $0x8] sm:$0xff]
    %v69 = vld [vmem:[%s2 + $0x10] sm:$0xff]
    %v70 = vld [vmem:[%s2 + $0x18] sm:$0xff]
    %v71 = vld [vmem:[%s1] sm:$0xf]
    %v72 = vld [vmem:[%s3] sm:$0x1]
    %v74 = vperm.slane %v72, 0
    %vm76 = vcmask 31744
    %v78 = vsel %vm76, %v65, 0
    %v81 = vsel %vm76, %v66, 0
    %vm83 = vcmask 1043456
    %v85 = vsel %vm83, %v71, 0
    %87 = vmatpush.msra.mxu0 0.0
    %88 = vmatpush.msra.mxu0 0.0
    %89 = vmatpush.msra.mxu0 0.0
    %90 = vmatpush.msra.mxu0 0.0
    %91 = vmatpush.msra.mxu0 0.0
    %92 = vmatpush.msra.mxu0 0.0
    %93 = vmatpush.msra.mxu0 0.0
    %94 = vmatpush.msra.mxu0 0.0
    %95 = vmatpush.msra.mxu0 0.0
    %96 = vmatpush.msra.mxu0 0.0
    %97 = vmatpush.msra.mxu0 0.0
    %98 = vmatpush.msra.mxu0 0.0
    %99 = vmatpush.msra.mxu0 0.0
    %100 = vmatpush.msra.mxu0 0.0
    %101 = vmatpush.msra.mxu0 0.0
    %102 = vmatpush.msra.mxu0 %v85
    %103 = vmatmul.f32.gmra.mxu0 %v78
    %v104 = vpop.f32.mrf.mxu0
    %v105 = vadd.f32 %v74, %v104
    %106 = vmatmul.f32.gmra.mxu0 %v81
    %v107 = vpop.f32.mrf.mxu0
    %v108 = vadd.f32 %v74, %v107
    %109 = vdwg.mxu0
    %v110 = vrot.slane %v105, 4
    %vm111 = vcmask 1047556
    %v112 = vsel %vm111, 0.0, %v110
    %v114 = vunpack.c.l.s4 1983009808
    %v115 = vunpack.c.0.s8 %v114
    %v116 = vperm.slane %v105, %v115
    %v118 = vunpack.c.l.s4 1983009808
    %v119 = vunpack.c.0.s8 %v118
    %v120 = vperm.slane %v112, %v119
    %v121 = vrot.slane %v108, 4
    %v122 = vsel %vm111, 0.0, %v121
    %v124 = vunpack.c.l.s4 1983009808
    %v125 = vunpack.c.0.s8 %v124
    %v126 = vperm.slane %v108, %v125
    %v128 = vunpack.c.l.s4 1983009808
    %v129 = vunpack.c.0.s8 %v128
    %v130 = vperm.slane %v122, %v129
    %v131 = vrot.slane %v126, 4
    %v132 = vsel %vm111, %v131, %v116
    %v133 = vrot.slane %v116, 4
    %v134 = vsel %vm111, %v126, %v133
    %v136 = vunpack.c.l.s4 1934713408
    %v137 = vunpack.c.0.s8 %v136
    %v138 = vperm.slane %v132, %v137
    %v140 = vunpack.c.l.s4 1934713408
    %v141 = vunpack.c.0.s8 %v140
    %v142 = vperm.slane %v134, %v141
    %v143 = vrot.slane %v130, 4
    %v144 = vsel %vm111, %v143, %v120
    %v145 = vrot.slane %v120, 4
    %v146 = vsel %vm111, %v130, %v145
    %v148 = vunpack.c.l.s4 1934713408
    %v149 = vunpack.c.0.s8 %v148
    %v150 = vperm.slane %v144, %v149
    %v152 = vunpack.c.l.s4 1934713408
    %v153 = vunpack.c.0.s8 %v152
    %v154 = vperm.slane %v146, %v153
    %v155 = vrot.slane %v138, 4
    %v156 = vsel %vm111, 0.0, %v155
    %v157 = vrot.slane %v142, 4
    %v158 = vsel %vm111, 0.0, %v157
    %v159 = vrot.slane %v150, 4
    %v160 = vsel %vm111, 0.0, %v159
    %v161 = vrot.slane %v154, 4
    %v162 = vsel %vm111, 0.0, %v161
    %vm163 = vcmask 261120
    %v165 = vsel %vm163, 0.0, 0
    %167 = vmatpush.msra.mxu0 0.0
    %168 = vmatpush.msra.mxu0 0.0
    %169 = vmatpush.msra.mxu0 0.0
    %170 = vmatpush.msra.mxu0 0.0
    %171 = vmatpush.msra.mxu0 0.0
    %172 = vmatpush.msra.mxu0 0.0
    %173 = vmatpush.msra.mxu0 0.0
    %174 = vmatpush.msra.mxu0 0.0
    %175 = vmatpush.msra.mxu0 0.0
    %176 = vmatpush.msra.mxu0 0.0
    %177 = vmatpush.msra.mxu0 0.0
    %178 = vmatpush.msra.mxu0 0.0
    %179 = vmatpush.msra.mxu0 %v70
    %180 = vmatpush.msra.mxu0 %v69
    %181 = vmatpush.msra.mxu0 %v68
    %182 = vmatpush.msra.mxu0 %v67
    %183 = vmatmul.f32.gmra.mxu0 %v165
    %v184 = vpop.f32.mrf.mxu0
    %v185 = vadd.f32 0.0, %v184
    %186 = vdwg.mxu0
    %v187 = vadd.f32 %v138, %v185
    %v188 = vxor.u32 %v187, 2147483648
    %v189 = vmul.f32 %v188, 1.442695
    %v190 = vpow.pop %v189
    %v191 = vadd.f32 %v190, 1.0
    %v192 = vrcp.pop %v191
    %v193 = vmul.f32 %v191, %v192
    %v194 = vsub.f32 1.0, %v193
    %v195 = vmul.f32 %v192, %v194
    %v196 = vadd.f32 %v192, %v195
    %vm197 = vweird.f32 %v191
    %vm198 = vweird.f32 %v192
    %vm199 = vmor %vm197, %vm198
    %v200 = vsel %vm199, %v192, %v196
    %v201 = vand.u32 2147483647, %v191
    %vm202 = vcmp.eq.f32.partialorder %v201, 8.507059e+37
    %v203 = vand.u32 %v191, 2147483648
    %v204 = vor.u32 1.1754944e-38, %v203
    %v205 = vsel %vm202, %v204, %v200
    %v206 = vmul.f32 1.0, %v205
    %v207 = vtanh.pop %v187
    %v208 = vmul.f32 %v206, 0.0
    %210 = vrot.lane.b32.xlu0 %v207, 64
    %v211 = vpop.permute.xlu0 %210
    %v213 = vmul.f32 %v206, %v211
    %215 = vrot.lane.b32.xlu0 %v213, 32
    %v216 = vpop.permute.xlu0 %215
    %v218 = vadd.f32 %v208, %v216
    %v219 = vtanh.pop %v218
    %221 = vrot.lane.b32.xlu0 %v219, 64
    %v222 = vpop.permute.xlu0 %221
    %v224 = vmul.f32 %v206, %v222
    %226 = vrot.lane.b32.xlu0 %v224, 32
    %v227 = vpop.permute.xlu0 %226
    %vm229 = vcmask 254976
    %230 = vst.msk [vmem:[#allocation2] sm:$0x3] %vm229, %v227
    %v231 = vsel %vm163, %v227, 0
    %233 = vmatpush.msra.mxu0 0.0
    %234 = vmatpush.msra.mxu0 0.0
    %235 = vmatpush.msra.mxu0 0.0
    %236 = vmatpush.msra.mxu0 0.0
    %237 = vmatpush.msra.mxu0 0.0
    %238 = vmatpush.msra.mxu0 0.0
    %239 = vmatpush.msra.mxu0 0.0
    %240 = vmatpush.msra.mxu0 0.0
    %241 = vmatpush.msra.mxu0 0.0
    %242 = vmatpush.msra.mxu0 0.0
    %243 = vmatpush.msra.mxu0 0.0
    %244 = vmatpush.msra.mxu0 0.0
    %245 = vmatpush.msra.mxu0 %v70
    %246 = vmatpush.msra.mxu0 %v69
    %247 = vmatpush.msra.mxu0 %v68
    %248 = vmatpush.msra.mxu0 %v67
    %249 = vmatmul.f32.gmra.mxu0 %v231
    %v250 = vpop.f32.mrf.mxu0
    %v251 = vadd.f32 0.0, %v250
    %252 = vdwg.mxu0
    %v253 = vadd.f32 %v156, %v251
    %v254 = vxor.u32 %v253, 2147483648
    %v255 = vmul.f32 %v254, 1.442695
    %v256 = vpow.pop %v255
    %v257 = vadd.f32 %v256, 1.0
    %v258 = vrcp.pop %v257
    %v259 = vmul.f32 %v257, %v258
    %v260 = vsub.f32 1.0, %v259
    %v261 = vmul.f32 %v258, %v260
    %v262 = vadd.f32 %v258, %v261
    %vm263 = vweird.f32 %v257
    %vm264 = vweird.f32 %v258
    %vm265 = vmor %vm263, %vm264
    %v266 = vsel %vm265, %v258, %v262
    %v267 = vand.u32 2147483647, %v257
    %vm268 = vcmp.eq.f32.partialorder %v267, 8.507059e+37
    %v269 = vand.u32 %v257, 2147483648
    %v270 = vor.u32 1.1754944e-38, %v269
    %v271 = vsel %vm268, %v270, %v266
    %v272 = vmul.f32 1.0, %v271
    %v273 = vtanh.pop %v253
    %v274 = vmul.f32 %v272, %v218
    %276 = vrot.lane.b32.xlu0 %v273, 64
    %v277 = vpop.permute.xlu0 %276
    %v279 = vmul.f32 %v272, %v277
    %281 = vrot.lane.b32.xlu0 %v279, 32
    %v282 = vpop.permute.xlu0 %281
    %v284 = vadd.f32 %v274, %v282
    %v285 = vtanh.pop %v284
    %287 = vrot.lane.b32.xlu0 %v285, 64
    %v288 = vpop.permute.xlu0 %287
    %v290 = vmul.f32 %v272, %v288
    %292 = vrot.lane.b32.xlu0 %v290, 32
    %v293 = vpop.permute.xlu0 %292
    %s295 = scalar_lea.vmem [#allocation2], 2
    %296 = vst.msk [vmem:[%s295] sm:$0x3] %vm229, %v293
    %v297 = vsel %vm163, %v293, 0
    %299 = vmatpush.msra.mxu0 0.0
    %300 = vmatpush.msra.mxu0 0.0
    %301 = vmatpush.msra.mxu0 0.0
    %302 = vmatpush.msra.mxu0 0.0
    %303 = vmatpush.msra.mxu0 0.0
    %304 = vmatpush.msra.mxu0 0.0
    %305 = vmatpush.msra.mxu0 0.0
    %306 = vmatpush.msra.mxu0 0.0
    %307 = vmatpush.msra.mxu0 0.0
    %308 = vmatpush.msra.mxu0 0.0
    %309 = vmatpush.msra.mxu0 0.0
    %310 = vmatpush.msra.mxu0 0.0
    %311 = vmatpush.msra.mxu0 %v70
    %312 = vmatpush.msra.mxu0 %v69
    %313 = vmatpush.msra.mxu0 %v68
    %314 = vmatpush.msra.mxu0 %v67
    %315 = vmatmul.f32.gmra.mxu0 %v297
    %v316 = vpop.f32.mrf.mxu0
    %v317 = vadd.f32 0.0, %v316
    %318 = vdwg.mxu0
    %v319 = vadd.f32 %v142, %v317
    %v320 = vxor.u32 %v319, 2147483648
    %v321 = vmul.f32 %v320, 1.442695
    %v322 = vpow.pop %v321
    %v323 = vadd.f32 %v322, 1.0
    %v324 = vrcp.pop %v323
    %v325 = vmul.f32 %v323, %v324
    %v326 = vsub.f32 1.0, %v325
    %v327 = vmul.f32 %v324, %v326
    %v328 = vadd.f32 %v324, %v327
    %vm329 = vweird.f32 %v323
    %vm330 = vweird.f32 %v324
    %vm331 = vmor %vm329, %vm330
    %v332 = vsel %vm331, %v324, %v328
    %v333 = vand.u32 2147483647, %v323
    %vm334 = vcmp.eq.f32.partialorder %v333, 8.507059e+37
    %v335 = vand.u32 %v323, 2147483648
    %v336 = vor.u32 1.1754944e-38, %v335
    %v337 = vsel %vm334, %v336, %v332
    %v338 = vmul.f32 1.0, %v337
    %v339 = vtanh.pop %v319
    %v340 = vmul.f32 %v338, %v284
    %342 = vrot.lane.b32.xlu0 %v339, 64
    %v343 = vpop.permute.xlu0 %342
    %v345 = vmul.f32 %v338, %v343
    %347 = vrot.lane.b32.xlu0 %v345, 32
    %v348 = vpop.permute.xlu0 %347
    %v350 = vadd.f32 %v340, %v348
    %v351 = vtanh.pop %v350
    %353 = vrot.lane.b32.xlu0 %v351, 64
    %v354 = vpop.permute.xlu0 %353
    %v356 = vmul.f32 %v338, %v354
    %358 = vrot.lane.b32.xlu0 %v356, 32
    %v359 = vpop.permute.xlu0 %358
    %s361 = scalar_lea.vmem [#allocation2], 4
    %362 = vst.msk [vmem:[%s361] sm:$0x3] %vm229, %v359
    %v363 = vsel %vm163, %v359, 0
    %365 = vmatpush.msra.mxu0 0.0
    %366 = vmatpush.msra.mxu0 0.0
    %367 = vmatpush.msra.mxu0 0.0
    %368 = vmatpush.msra.mxu0 0.0
    %369 = vmatpush.msra.mxu0 0.0
    %370 = vmatpush.msra.mxu0 0.0
    %371 = vmatpush.msra.mxu0 0.0
    %372 = vmatpush.msra.mxu0 0.0
    %373 = vmatpush.msra.mxu0 0.0
    %374 = vmatpush.msra.mxu0 0.0
    %375 = vmatpush.msra.mxu0 0.0
    %376 = vmatpush.msra.mxu0 0.0
    %377 = vmatpush.msra.mxu0 %v70
    %378 = vmatpush.msra.mxu0 %v69
    %379 = vmatpush.msra.mxu0 %v68
    %380 = vmatpush.msra.mxu0 %v67
    %381 = vmatmul.f32.gmra.mxu0 %v363
    %v382 = vpop.f32.mrf.mxu0
    %v383 = vadd.f32 0.0, %v382
    %384 = vdwg.mxu0
    %v385 = vadd.f32 %v158, %v383
    %v386 = vxor.u32 %v385, 2147483648
    %v387 = vmul.f32 %v386, 1.442695
    %v388 = vpow.pop %v387
    %v389 = vadd.f32 %v388, 1.0
    %v390 = vrcp.pop %v389
    %v391 = vmul.f32 %v389, %v390
    %v392 = vsub.f32 1.0, %v391
    %v393 = vmul.f32 %v390, %v392
    %v394 = vadd.f32 %v390, %v393
    %vm395 = vweird.f32 %v389
    %vm396 = vweird.f32 %v390
    %vm397 = vmor %vm395, %vm396
    %v398 = vsel %vm397, %v390, %v394
    %v399 = vand.u32 2147483647, %v389
    %vm400 = vcmp.eq.f32.partialorder %v399, 8.507059e+37
    %v401 = vand.u32 %v389, 2147483648
    %v402 = vor.u32 1.1754944e-38, %v401
    %v403 = vsel %vm400, %v402, %v398
    %v404 = vmul.f32 1.0, %v403
    %v405 = vtanh.pop %v385
    %v406 = vmul.f32 %v404, %v350
    %408 = vrot.lane.b32.xlu0 %v405, 64
    %v409 = vpop.permute.xlu0 %408
    %v411 = vmul.f32 %v404, %v409
    %413 = vrot.lane.b32.xlu0 %v411, 32
    %v414 = vpop.permute.xlu0 %413
    %v416 = vadd.f32 %v406, %v414
    %v417 = vtanh.pop %v416
    %419 = vrot.lane.b32.xlu0 %v417, 64
    %v420 = vpop.permute.xlu0 %419
    %v422 = vmul.f32 %v404, %v420
    %424 = vrot.lane.b32.xlu0 %v422, 32
    %v425 = vpop.permute.xlu0 %424
    %s427 = scalar_lea.vmem [#allocation2], 6
    %428 = vst.msk [vmem:[%s427] sm:$0x3] %vm229, %v425
    %v429 = vsel %vm163, %v425, 0
    %431 = vmatpush.msra.mxu0 0.0
    %432 = vmatpush.msra.mxu0 0.0
    %433 = vmatpush.msra.mxu0 0.0
    %434 = vmatpush.msra.mxu0 0.0
    %435 = vmatpush.msra.mxu0 0.0
    %436 = vmatpush.msra.mxu0 0.0
    %437 = vmatpush.msra.mxu0 0.0
    %438 = vmatpush.msra.mxu0 0.0
    %439 = vmatpush.msra.mxu0 0.0
    %440 = vmatpush.msra.mxu0 0.0
    %441 = vmatpush.msra.mxu0 0.0
    %442 = vmatpush.msra.mxu0 0.0
    %443 = vmatpush.msra.mxu0 %v70
    %444 = vmatpush.msra.mxu0 %v69
    %445 = vmatpush.msra.mxu0 %v68
    %446 = vmatpush.msra.mxu0 %v67
    %447 = vmatmul.f32.gmra.mxu0 %v429
    %v448 = vpop.f32.mrf.mxu0
    %v449 = vadd.f32 0.0, %v448
    %450 = vdwg.mxu0
    %v451 = vadd.f32 %v150, %v449
    %v452 = vxor.u32 %v451, 2147483648
    %v453 = vmul.f32 %v452, 1.442695
    %v454 = vpow.pop %v453
    %v455 = vadd.f32 %v454, 1.0
    %v456 = vrcp.pop %v455
    %v457 = vmul.f32 %v455, %v456
    %v458 = vsub.f32 1.0, %v457
    %v459 = vmul.f32 %v456, %v458
    %v460 = vadd.f32 %v456, %v459
    %vm461 = vweird.f32 %v455
    %vm462 = vweird.f32 %v456
    %vm463 = vmor %vm461, %vm462
    %v464 = vsel %vm463, %v456, %v460
    %v465 = vand.u32 2147483647, %v455
    %vm466 = vcmp.eq.f32.partialorder %v465, 8.507059e+37
    %v467 = vand.u32 %v455, 2147483648
    %v468 = vor.u32 1.1754944e-38, %v467
    %v469 = vsel %vm466, %v468, %v464
    %v470 = vmul.f32 1.0, %v469
    %v471 = vtanh.pop %v451
    %v472 = vmul.f32 %v470, %v416
    %474 = vrot.lane.b32.xlu0 %v471, 64
    %v475 = vpop.permute.xlu0 %474
    %v477 = vmul.f32 %v470, %v475
    %479 = vrot.lane.b32.xlu0 %v477, 32
    %v480 = vpop.permute.xlu0 %479
    %v482 = vadd.f32 %v472, %v480
    %v483 = vtanh.pop %v482
    %485 = vrot.lane.b32.xlu0 %v483, 64
    %v486 = vpop.permute.xlu0 %485
    %v488 = vmul.f32 %v470, %v486
    %490 = vrot.lane.b32.xlu0 %v488, 32
    %v491 = vpop.permute.xlu0 %490
    %s493 = scalar_lea.vmem [#allocation2], 8
    %494 = vst.msk [vmem:[%s493] sm:$0x3] %vm229, %v491
    %v495 = vsel %vm163, %v491, 0
    %497 = vmatpush.msra.mxu0 0.0
    %498 = vmatpush.msra.mxu0 0.0
    %499 = vmatpush.msra.mxu0 0.0
    %500 = vmatpush.msra.mxu0 0.0
    %501 = vmatpush.msra.mxu0 0.0
    %502 = vmatpush.msra.mxu0 0.0
    %503 = vmatpush.msra.mxu0 0.0
    %504 = vmatpush.msra.mxu0 0.0
    %505 = vmatpush.msra.mxu0 0.0
    %506 = vmatpush.msra.mxu0 0.0
    %507 = vmatpush.msra.mxu0 0.0
    %508 = vmatpush.msra.mxu0 0.0
    %509 = vmatpush.msra.mxu0 %v70
    %510 = vmatpush.msra.mxu0 %v69
    %511 = vmatpush.msra.mxu0 %v68
    %512 = vmatpush.msra.mxu0 %v67
    %513 = vmatmul.f32.gmra.mxu0 %v495
    %v514 = vpop.f32.mrf.mxu0
    %v515 = vadd.f32 0.0, %v514
    %516 = vdwg.mxu0
    %v517 = vadd.f32 %v160, %v515
    %v518 = vxor.u32 %v517, 2147483648
    %v519 = vmul.f32 %v518, 1.442695
    %v520 = vpow.pop %v519
    %v521 = vadd.f32 %v520, 1.0
    %v522 = vrcp.pop %v521
    %v523 = vmul.f32 %v521, %v522
    %v524 = vsub.f32 1.0, %v523
    %v525 = vmul.f32 %v522, %v524
    %v526 = vadd.f32 %v522, %v525
    %vm527 = vweird.f32 %v521
    %vm528 = vweird.f32 %v522
    %vm529 = vmor %vm527, %vm528
    %v530 = vsel %vm529, %v522, %v526
    %v531 = vand.u32 2147483647, %v521
    %vm532 = vcmp.eq.f32.partialorder %v531, 8.507059e+37
    %v533 = vand.u32 %v521, 2147483648
    %v534 = vor.u32 1.1754944e-38, %v533
    %v535 = vsel %vm532, %v534, %v530
    %v536 = vmul.f32 1.0, %v535
    %v537 = vtanh.pop %v517
    %v538 = vmul.f32 %v536, %v482
    %540 = vrot.lane.b32.xlu0 %v537, 64
    %v541 = vpop.permute.xlu0 %540
    %v543 = vmul.f32 %v536, %v541
    %545 = vrot.lane.b32.xlu0 %v543, 32
    %v546 = vpop.permute.xlu0 %545
    %v548 = vadd.f32 %v538, %v546
    %v549 = vtanh.pop %v548
    %551 = vrot.lane.b32.xlu0 %v549, 64
    %v552 = vpop.permute.xlu0 %551
    %v554 = vmul.f32 %v536, %v552
    %556 = vrot.lane.b32.xlu0 %v554, 32
    %v557 = vpop.permute.xlu0 %556
    %s559 = scalar_lea.vmem [#allocation2], 10
    %560 = vst.msk [vmem:[%s559] sm:$0x3] %vm229, %v557
    %v561 = vsel %vm163, %v557, 0
    %563 = vmatpush.msra.mxu0 0.0
    %564 = vmatpush.msra.mxu0 0.0
    %565 = vmatpush.msra.mxu0 0.0
    %566 = vmatpush.msra.mxu0 0.0
    %567 = vmatpush.msra.mxu0 0.0
    %568 = vmatpush.msra.mxu0 0.0
    %569 = vmatpush.msra.mxu0 0.0
    %570 = vmatpush.msra.mxu0 0.0
    %571 = vmatpush.msra.mxu0 0.0
    %572 = vmatpush.msra.mxu0 0.0
    %573 = vmatpush.msra.mxu0 0.0
    %574 = vmatpush.msra.mxu0 0.0
    %575 = vmatpush.msra.mxu0 %v70
    %576 = vmatpush.msra.mxu0 %v69
    %577 = vmatpush.msra.mxu0 %v68
    %578 = vmatpush.msra.mxu0 %v67
    %579 = vmatmul.f32.gmra.mxu0 %v561
    %v580 = vpop.f32.mrf.mxu0
    %v581 = vadd.f32 0.0, %v580
    %582 = vdwg.mxu0
    %v583 = vadd.f32 %v154, %v581
    %v584 = vxor.u32 %v583, 2147483648
    %v585 = vmul.f32 %v584, 1.442695
    %v586 = vpow.pop %v585
    %v587 = vadd.f32 %v586, 1.0
    %v588 = vrcp.pop %v587
    %v589 = vmul.f32 %v587, %v588
    %v590 = vsub.f32 1.0, %v589
    %v591 = vmul.f32 %v588, %v590
    %v592 = vadd.f32 %v588, %v591
    %vm593 = vweird.f32 %v587
    %vm594 = vweird.f32 %v588
    %vm595 = vmor %vm593, %vm594
    %v596 = vsel %vm595, %v588, %v592
    %v597 = vand.u32 2147483647, %v587
    %vm598 = vcmp.eq.f32.partialorder %v597, 8.507059e+37
    %v599 = vand.u32 %v587, 2147483648
    %v600 = vor.u32 1.1754944e-38, %v599
    %v601 = vsel %vm598, %v600, %v596
    %v602 = vmul.f32 1.0, %v601
    %v603 = vtanh.pop %v583
    %v604 = vmul.f32 %v602, %v548
    %606 = vrot.lane.b32.xlu0 %v603, 64
    %v607 = vpop.permute.xlu0 %606
    %v609 = vmul.f32 %v602, %v607
    %611 = vrot.lane.b32.xlu0 %v609, 32
    %v612 = vpop.permute.xlu0 %611
    %v614 = vadd.f32 %v604, %v612
    %v615 = vtanh.pop %v614
    %617 = vrot.lane.b32.xlu0 %v615, 64
    %v618 = vpop.permute.xlu0 %617
    %v620 = vmul.f32 %v602, %v618
    %622 = vrot.lane.b32.xlu0 %v620, 32
    %v623 = vpop.permute.xlu0 %622
    %s625 = scalar_lea.vmem [#allocation2], 12
    %626 = vst.msk [vmem:[%s625] sm:$0x3] %vm229, %v623
    %v627 = vsel %vm163, %v623, 0
    %629 = vmatpush.msra.mxu0 0.0
    %630 = vmatpush.msra.mxu0 0.0
    %631 = vmatpush.msra.mxu0 0.0
    %632 = vmatpush.msra.mxu0 0.0
    %633 = vmatpush.msra.mxu0 0.0
    %634 = vmatpush.msra.mxu0 0.0
    %635 = vmatpush.msra.mxu0 0.0
    %636 = vmatpush.msra.mxu0 0.0
    %637 = vmatpush.msra.mxu0 0.0
    %638 = vmatpush.msra.mxu0 0.0
    %639 = vmatpush.msra.mxu0 0.0
    %640 = vmatpush.msra.mxu0 0.0
    %641 = vmatpush.msra.mxu0 %v70
    %642 = vmatpush.msra.mxu0 %v69
    %643 = vmatpush.msra.mxu0 %v68
    %644 = vmatpush.msra.mxu0 %v67
    %645 = vmatmul.f32.gmra.mxu0 %v627
    %v646 = vpop.f32.mrf.mxu0
    %v647 = vadd.f32 0.0, %v646
    %648 = vdwg.mxu0
    %v649 = vadd.f32 %v162, %v647
    %v650 = vxor.u32 %v649, 2147483648
    %v651 = vmul.f32 %v650, 1.442695
    %v652 = vpow.pop %v651
    %v653 = vadd.f32 %v652, 1.0
    %v654 = vrcp.pop %v653
    %v655 = vmul.f32 %v653, %v654
    %v656 = vsub.f32 1.0, %v655
    %v657 = vmul.f32 %v654, %v656
    %v658 = vadd.f32 %v654, %v657
    %vm659 = vweird.f32 %v653
    %vm660 = vweird.f32 %v654
    %vm661 = vmor %vm659, %vm660
    %v662 = vsel %vm661, %v654, %v658
    %v663 = vand.u32 2147483647, %v653
    %vm664 = vcmp.eq.f32.partialorder %v663, 8.507059e+37
    %v665 = vand.u32 %v653, 2147483648
    %v666 = vor.u32 1.1754944e-38, %v665
    %v667 = vsel %vm664, %v666, %v662
    %v668 = vmul.f32 1.0, %v667
    %v669 = vtanh.pop %v649
    %v670 = vmul.f32 %v668, %v614
    %672 = vrot.lane.b32.xlu0 %v669, 64
    %v673 = vpop.permute.xlu0 %672
    %v675 = vmul.f32 %v668, %v673
    %677 = vrot.lane.b32.xlu0 %v675, 32
    %v678 = vpop.permute.xlu0 %677
    %v680 = vadd.f32 %v670, %v678
    %v681 = vtanh.pop %v680
    %683 = vrot.lane.b32.xlu0 %v681, 64
    %v684 = vpop.permute.xlu0 %683
    %v686 = vmul.f32 %v668, %v684
    %688 = vrot.lane.b32.xlu0 %v686, 32
    %v689 = vpop.permute.xlu0 %688
    %s691 = scalar_lea.vmem [#allocation2], 14
    %692 = vst.msk [vmem:[%s691] sm:$0x3] %vm229, %v689
    %v693 = vld [vmem:[#allocation2] sm:$0x3]
    %v694 = vld [vmem:[#allocation2 + $0x2] sm:$0x3]
    %v695 = vld [vmem:[#allocation2 + $0x4] sm:$0x3]
    %v696 = vld [vmem:[#allocation2 + $0x6] sm:$0x3]
    %v697 = vld [vmem:[#allocation2 + $0x8] sm:$0x3]
    %v698 = vld [vmem:[#allocation2 + $0xa] sm:$0x3]
    %v699 = vld [vmem:[#allocation2 + $0xc] sm:$0x3]
    %v700 = vld [vmem:[#allocation2 + $0xe] sm:$0x3]
    %v701 = vld [vmem:[#allocation6] sm:$0xff]
    %v702 = vld [vmem:[#allocation6 + $0x8] sm:$0xff]
    %v703 = vld [vmem:[#allocation6 + $0x10] sm:$0xff]
    %v704 = vld [vmem:[#allocation6 + $0x18] sm:$0xff]
    %v705 = vld [vmem:[#allocation3] sm:$0xff]
    %v706 = vld [vmem:[#allocation3 + $0x8] sm:$0xff]
    %v707 = vld [vmem:[#allocation3 + $0x10] sm:$0xff]
    %v708 = vld [vmem:[#allocation3 + $0x18] sm:$0xff]
    %v709 = vld [vmem:[%s6] sm:$0x1]
    %v711 = vperm.slane %v709, 0
    %721 = vst [vmem:[#allocation1] ss:$4 sm:$0xff] %v693
    %s722 = scalar_lea.vmem [#allocation1], 1
    %723 = vst [vmem:[%s722] ss:$4 sm:$0xff] %v694
    %s724 = scalar_lea.vmem [#allocation1], 2
    %725 = vst [vmem:[%s724] ss:$4 sm:$0xff] %v695
    %s726 = scalar_lea.vmem [#allocation1], 3
    %727 = vst [vmem:[%s726] ss:$4 sm:$0xff] %v696
    %s728 = scalar_lea.vmem [#allocation1], 32
    %729 = vst [vmem:[%s728] ss:$4 sm:$0xff] %v697
    %s730 = scalar_lea.vmem [#allocation1], 33
    %731 = vst [vmem:[%s730] ss:$4 sm:$0xff] %v698
    %s732 = scalar_lea.vmem [#allocation1], 34
    %733 = vst [vmem:[%s732] ss:$4 sm:$0xff] %v699
    %s734 = scalar_lea.vmem [#allocation1], 35
    %735 = vst [vmem:[%s734] ss:$4 sm:$0xff] %v700
    %v736 = vld.sshfl [vmem:[#allocation1] sm:$0xff pattern:$0x73625140]
    %v737 = vld.sshfl [vmem:[#allocation1 + $0x20] sm:$0xff pattern:$0x73625140]
    %v738 = vsel %vm163, %v736, 0
    %v740 = vsel %vm163, %v737, 0
    %742 = vmatpush.msra.mxu0 0.0
    %743 = vmatpush.msra.mxu0 0.0
    %744 = vmatpush.msra.mxu0 0.0
    %745 = vmatpush.msra.mxu0 0.0
    %746 = vmatpush.msra.mxu0 0.0
    %747 = vmatpush.msra.mxu0 0.0
    %748 = vmatpush.msra.mxu0 0.0
    %749 = vmatpush.msra.mxu0 0.0
    %750 = vmatpush.msra.mxu0 0.0
    %751 = vmatpush.msra.mxu0 0.0
    %752 = vmatpush.msra.mxu0 0.0
    %753 = vmatpush.msra.mxu0 0.0
    %754 = vmatpush.msra.mxu0 %v708
    %755 = vmatpush.msra.mxu0 %v707
    %756 = vmatpush.msra.mxu0 %v706
    %757 = vmatpush.msra.mxu0 %v705
    %758 = vmatmul.f32.gmra.mxu0 %v738
    %v759 = vpop.f32.mrf.mxu0
    %v760 = vadd.f32 %v711, %v759
    %761 = vmatmul.f32.gmra.mxu0 %v740
    %v762 = vpop.f32.mrf.mxu0
    %v763 = vadd.f32 %v711, %v762
    %764 = vdwg.mxu0
    %v767 = vrot.slane %v760, 2
    %v768 = vrot.slane %v760, 4
    %v769 = vrot.slane %v760, 6
    %v770 = vrot.slane %v763, 2
    %v771 = vrot.slane %v763, 4
    %v772 = vrot.slane %v763, 6
    %779 = vmatpush.msra.mxu0 0.0
    %780 = vmatpush.msra.mxu0 0.0
    %781 = vmatpush.msra.mxu0 0.0
    %782 = vmatpush.msra.mxu0 0.0
    %783 = vmatpush.msra.mxu0 0.0
    %784 = vmatpush.msra.mxu0 0.0
    %785 = vmatpush.msra.mxu0 0.0
    %786 = vmatpush.msra.mxu0 0.0
    %787 = vmatpush.msra.mxu0 0.0
    %788 = vmatpush.msra.mxu0 0.0
    %789 = vmatpush.msra.mxu0 0.0
    %790 = vmatpush.msra.mxu0 0.0
    %791 = vmatpush.msra.mxu0 %v704
    %792 = vmatpush.msra.mxu0 %v703
    %793 = vmatpush.msra.mxu0 %v702
    %794 = vmatpush.msra.mxu0 %v701
    %795 = vmatmul.f32.gmra.mxu0 %v165
    %v796 = vpop.f32.mrf.mxu0
    %v797 = vadd.f32 0.0, %v796
    %798 = vdwg.mxu0
    %v799 = vadd.f32 %v760, %v797
    %v800 = vxor.u32 %v799, 2147483648
    %v801 = vmul.f32 %v800, 1.442695
    %v802 = vpow.pop %v801
    %v803 = vadd.f32 %v802, 1.0
    %v804 = vrcp.pop %v803
    %v805 = vmul.f32 %v803, %v804
    %v806 = vsub.f32 1.0, %v805
    %v807 = vmul.f32 %v804, %v806
    %v808 = vadd.f32 %v804, %v807
    %vm809 = vweird.f32 %v803
    %vm810 = vweird.f32 %v804
    %vm811 = vmor %vm809, %vm810
    %v812 = vsel %vm811, %v804, %v808
    %v813 = vand.u32 2147483647, %v803
    %vm814 = vcmp.eq.f32.partialorder %v813, 8.507059e+37
    %v815 = vand.u32 %v803, 2147483648
    %v816 = vor.u32 1.1754944e-38, %v815
    %v817 = vsel %vm814, %v816, %v812
    %v818 = vmul.f32 1.0, %v817
    %v819 = vtanh.pop %v799
    %v820 = vmul.f32 %v818, 0.0
    %822 = vrot.lane.b32.xlu0 %v819, 64
    %v823 = vpop.permute.xlu0 %822
    %v825 = vmul.f32 %v818, %v823
    %827 = vrot.lane.b32.xlu0 %v825, 32
    %v828 = vpop.permute.xlu0 %827
    %v830 = vadd.f32 %v820, %v828
    %v831 = vtanh.pop %v830
    %833 = vrot.lane.b32.xlu0 %v831, 64
    %v834 = vpop.permute.xlu0 %833
    %v836 = vmul.f32 %v818, %v834
    %838 = vst [vmem:[#allocation1] ss:$4 sm:$0xff] %v836
    %v839 = vld.sshfl [vmem:[#allocation1] sm:$0xff pattern:$0x73625140]
    %840 = vrot.lane.b32.xlu0 %v839, 32
    %v841 = vpop.permute.xlu0 %840
    %v842 = vsel %vm163, %v841, 0
    %844 = vmatpush.msra.mxu0 0.0
    %845 = vmatpush.msra.mxu0 0.0
    %846 = vmatpush.msra.mxu0 0.0
    %847 = vmatpush.msra.mxu0 0.0
    %848 = vmatpush.msra.mxu0 0.0
    %849 = vmatpush.msra.mxu0 0.0
    %850 = vmatpush.msra.mxu0 0.0
    %851 = vmatpush.msra.mxu0 0.0
    %852 = vmatpush.msra.mxu0 0.0
    %853 = vmatpush.msra.mxu0 0.0
    %854 = vmatpush.msra.mxu0 0.0
    %855 = vmatpush.msra.mxu0 0.0
    %856 = vmatpush.msra.mxu0 %v704
    %857 = vmatpush.msra.mxu0 %v703
    %858 = vmatpush.msra.mxu0 %v702
    %859 = vmatpush.msra.mxu0 %v701
    %860 = vmatmul.f32.gmra.mxu0 %v842
    %v861 = vpop.f32.mrf.mxu0
    %v862 = vadd.f32 0.0, %v861
    %863 = vdwg.mxu0
    %v864 = vadd.f32 %v767, %v862
    %v865 = vxor.u32 %v864, 2147483648
    %v866 = vmul.f32 %v865, 1.442695
    %v867 = vpow.pop %v866
    %v868 = vadd.f32 %v867, 1.0
    %v869 = vrcp.pop %v868
    %v870 = vmul.f32 %v868, %v869
    %v871 = vsub.f32 1.0, %v870
    %v872 = vmul.f32 %v869, %v871
    %v873 = vadd.f32 %v869, %v872
    %vm874 = vweird.f32 %v868
    %vm875 = vweird.f32 %v869
    %vm876 = vmor %vm874, %vm875
    %v877 = vsel %vm876, %v869, %v873
    %v878 = vand.u32 2147483647, %v868
    %vm879 = vcmp.eq.f32.partialorder %v878, 8.507059e+37
    %v880 = vand.u32 %v868, 2147483648
    %v881 = vor.u32 1.1754944e-38, %v880
    %v882 = vsel %vm879, %v881, %v877
    %v883 = vmul.f32 1.0, %v882
    %v884 = vtanh.pop %v864
    %v885 = vmul.f32 %v883, %v830
    %887 = vrot.lane.b32.xlu0 %v884, 64
    %v888 = vpop.permute.xlu0 %887
    %v890 = vmul.f32 %v883, %v888
    %892 = vrot.lane.b32.xlu0 %v890, 32
    %v893 = vpop.permute.xlu0 %892
    %v895 = vadd.f32 %v885, %v893
    %v896 = vtanh.pop %v895
    %898 = vrot.lane.b32.xlu0 %v896, 64
    %v899 = vpop.permute.xlu0 %898
    %v901 = vmul.f32 %v883, %v899
    %903 = vst [vmem:[#allocation1] ss:$4 sm:$0xff] %v901
    %v904 = vld.sshfl [vmem:[#allocation1] sm:$0xff pattern:$0x73625140]
    %905 = vrot.lane.b32.xlu0 %v904, 32
    %v906 = vpop.permute.xlu0 %905
    %v907 = vsel %vm163, %v906, 0
    %909 = vmatpush.msra.mxu0 0.0
    %910 = vmatpush.msra.mxu0 0.0
    %911 = vmatpush.msra.mxu0 0.0
    %912 = vmatpush.msra.mxu0 0.0
    %913 = vmatpush.msra.mxu0 0.0
    %914 = vmatpush.msra.mxu0 0.0
    %915 = vmatpush.msra.mxu0 0.0
    %916 = vmatpush.msra.mxu0 0.0
    %917 = vmatpush.msra.mxu0 0.0
    %918 = vmatpush.msra.mxu0 0.0
    %919 = vmatpush.msra.mxu0 0.0
    %920 = vmatpush.msra.mxu0 0.0
    %921 = vmatpush.msra.mxu0 %v704
    %922 = vmatpush.msra.mxu0 %v703
    %923 = vmatpush.msra.mxu0 %v702
    %924 = vmatpush.msra.mxu0 %v701
    %925 = vmatmul.f32.gmra.mxu0 %v907
    %v926 = vpop.f32.mrf.mxu0
    %v927 = vadd.f32 0.0, %v926
    %928 = vdwg.mxu0
    %v929 = vadd.f32 %v768, %v927
    %v930 = vxor.u32 %v929, 2147483648
    %v931 = vmul.f32 %v930, 1.442695
    %v932 = vpow.pop %v931
    %v933 = vadd.f32 %v932, 1.0
    %v934 = vrcp.pop %v933
    %v935 = vmul.f32 %v933, %v934
    %v936 = vsub.f32 1.0, %v935
    %v937 = vmul.f32 %v934, %v936
    %v938 = vadd.f32 %v934, %v937
    %vm939 = vweird.f32 %v933
    %vm940 = vweird.f32 %v934
    %vm941 = vmor %vm939, %vm940
    %v942 = vsel %vm941, %v934, %v938
    %v943 = vand.u32 2147483647, %v933
    %vm944 = vcmp.eq.f32.partialorder %v943, 8.507059e+37
    %v945 = vand.u32 %v933, 2147483648
    %v946 = vor.u32 1.1754944e-38, %v945
    %v947 = vsel %vm944, %v946, %v942
    %v948 = vmul.f32 1.0, %v947
    %v949 = vtanh.pop %v929
    %v950 = vmul.f32 %v948, %v895
    %952 = vrot.lane.b32.xlu0 %v949, 64
    %v953 = vpop.permute.xlu0 %952
    %v955 = vmul.f32 %v948, %v953
    %957 = vrot.lane.b32.xlu0 %v955, 32
    %v958 = vpop.permute.xlu0 %957
    %v960 = vadd.f32 %v950, %v958
    %v961 = vtanh.pop %v960
    %963 = vrot.lane.b32.xlu0 %v961, 64
    %v964 = vpop.permute.xlu0 %963
    %v966 = vmul.f32 %v948, %v964
    %968 = vst [vmem:[#allocation1] ss:$4 sm:$0xff] %v966
    %v969 = vld.sshfl [vmem:[#allocation1] sm:$0xff pattern:$0x73625140]
    %970 = vrot.lane.b32.xlu0 %v969, 32
    %v971 = vpop.permute.xlu0 %970
    %v972 = vsel %vm163, %v971, 0
    %974 = vmatpush.msra.mxu0 0.0
    %975 = vmatpush.msra.mxu0 0.0
    %976 = vmatpush.msra.mxu0 0.0
    %977 = vmatpush.msra.mxu0 0.0
    %978 = vmatpush.msra.mxu0 0.0
    %979 = vmatpush.msra.mxu0 0.0
    %980 = vmatpush.msra.mxu0 0.0
    %981 = vmatpush.msra.mxu0 0.0
    %982 = vmatpush.msra.mxu0 0.0
    %983 = vmatpush.msra.mxu0 0.0
    %984 = vmatpush.msra.mxu0 0.0
    %985 = vmatpush.msra.mxu0 0.0
    %986 = vmatpush.msra.mxu0 %v704
    %987 = vmatpush.msra.mxu0 %v703
    %988 = vmatpush.msra.mxu0 %v702
    %989 = vmatpush.msra.mxu0 %v701
    %990 = vmatmul.f32.gmra.mxu0 %v972
    %v991 = vpop.f32.mrf.mxu0
    %v992 = vadd.f32 0.0, %v991
    %993 = vdwg.mxu0
    %v994 = vadd.f32 %v769, %v992
    %v995 = vxor.u32 %v994, 2147483648
    %v996 = vmul.f32 %v995, 1.442695
    %v997 = vpow.pop %v996
    %v998 = vadd.f32 %v997, 1.0
    %v999 = vrcp.pop %v998
    %v1000 = vmul.f32 %v998, %v999
    %v1001 = vsub.f32 1.0, %v1000
    %v1002 = vmul.f32 %v999, %v1001
    %v1003 = vadd.f32 %v999, %v1002
    %vm1004 = vweird.f32 %v998
    %vm1005 = vweird.f32 %v999
    %vm1006 = vmor %vm1004, %vm1005
    %v1007 = vsel %vm1006, %v999, %v1003
    %v1008 = vand.u32 2147483647, %v998
    %vm1009 = vcmp.eq.f32.partialorder %v1008, 8.507059e+37
    %v1010 = vand.u32 %v998, 2147483648
    %v1011 = vor.u32 1.1754944e-38, %v1010
    %v1012 = vsel %vm1009, %v1011, %v1007
    %v1013 = vmul.f32 1.0, %v1012
    %v1014 = vtanh.pop %v994
    %v1015 = vmul.f32 %v1013, %v960
    %1017 = vrot.lane.b32.xlu0 %v1014, 64
    %v1018 = vpop.permute.xlu0 %1017
    %v1020 = vmul.f32 %v1013, %v1018
    %1022 = vrot.lane.b32.xlu0 %v1020, 32
    %v1023 = vpop.permute.xlu0 %1022
    %v1025 = vadd.f32 %v1015, %v1023
    %v1026 = vtanh.pop %v1025
    %1028 = vrot.lane.b32.xlu0 %v1026, 64
    %v1029 = vpop.permute.xlu0 %1028
    %v1031 = vmul.f32 %v1013, %v1029
    %1033 = vst [vmem:[#allocation1] ss:$4 sm:$0xff] %v1031
    %v1034 = vld.sshfl [vmem:[#allocation1] sm:$0xff pattern:$0x73625140]
    %1035 = vrot.lane.b32.xlu0 %v1034, 32
    %v1036 = vpop.permute.xlu0 %1035
    %v1037 = vsel %vm163, %v1036, 0
    %1039 = vmatpush.msra.mxu0 0.0
    %1040 = vmatpush.msra.mxu0 0.0
    %1041 = vmatpush.msra.mxu0 0.0
    %1042 = vmatpush.msra.mxu0 0.0
    %1043 = vmatpush.msra.mxu0 0.0
    %1044 = vmatpush.msra.mxu0 0.0
    %1045 = vmatpush.msra.mxu0 0.0
    %1046 = vmatpush.msra.mxu0 0.0
    %1047 = vmatpush.msra.mxu0 0.0
    %1048 = vmatpush.msra.mxu0 0.0
    %1049 = vmatpush.msra.mxu0 0.0
    %1050 = vmatpush.msra.mxu0 0.0
    %1051 = vmatpush.msra.mxu0 %v704
    %1052 = vmatpush.msra.mxu0 %v703
    %1053 = vmatpush.msra.mxu0 %v702
    %1054 = vmatpush.msra.mxu0 %v701
    %1055 = vmatmul.f32.gmra.mxu0 %v1037
    %v1056 = vpop.f32.mrf.mxu0
    %v1057 = vadd.f32 0.0, %v1056
    %1058 = vdwg.mxu0
    %v1059 = vadd.f32 %v763, %v1057
    %v1060 = vxor.u32 %v1059, 2147483648
    %v1061 = vmul.f32 %v1060, 1.442695
    %v1062 = vpow.pop %v1061
    %v1063 = vadd.f32 %v1062, 1.0
    %v1064 = vrcp.pop %v1063
    %v1065 = vmul.f32 %v1063, %v1064
    %v1066 = vsub.f32 1.0, %v1065
    %v1067 = vmul.f32 %v1064, %v1066
    %v1068 = vadd.f32 %v1064, %v1067
    %vm1069 = vweird.f32 %v1063
    %vm1070 = vweird.f32 %v1064
    %vm1071 = vmor %vm1069, %vm1070
    %v1072 = vsel %vm1071, %v1064, %v1068
    %v1073 = vand.u32 2147483647, %v1063
    %vm1074 = vcmp.eq.f32.partialorder %v1073, 8.507059e+37
    %v1075 = vand.u32 %v1063, 2147483648
    %v1076 = vor.u32 1.1754944e-38, %v1075
    %v1077 = vsel %vm1074, %v1076, %v1072
    %v1078 = vmul.f32 1.0, %v1077
    %v1079 = vtanh.pop %v1059
    %v1080 = vmul.f32 %v1078, %v1025
    %1082 = vrot.lane.b32.xlu0 %v1079, 64
    %v1083 = vpop.permute.xlu0 %1082
    %v1085 = vmul.f32 %v1078, %v1083
    %1087 = vrot.lane.b32.xlu0 %v1085, 32
    %v1088 = vpop.permute.xlu0 %1087
    %v1090 = vadd.f32 %v1080, %v1088
    %v1091 = vtanh.pop %v1090
    %1093 = vrot.lane.b32.xlu0 %v1091, 64
    %v1094 = vpop.permute.xlu0 %1093
    %v1096 = vmul.f32 %v1078, %v1094
    %1098 = vst [vmem:[#allocation1] ss:$4 sm:$0xff] %v1096
    %v1099 = vld.sshfl [vmem:[#allocation1] sm:$0xff pattern:$0x73625140]
    %1100 = vrot.lane.b32.xlu0 %v1099, 32
    %v1101 = vpop.permute.xlu0 %1100
    %v1102 = vsel %vm163, %v1101, 0
    %1104 = vmatpush.msra.mxu0 0.0
    %1105 = vmatpush.msra.mxu0 0.0
    %1106 = vmatpush.msra.mxu0 0.0
    %1107 = vmatpush.msra.mxu0 0.0
    %1108 = vmatpush.msra.mxu0 0.0
    %1109 = vmatpush.msra.mxu0 0.0
    %1110 = vmatpush.msra.mxu0 0.0
    %1111 = vmatpush.msra.mxu0 0.0
    %1112 = vmatpush.msra.mxu0 0.0
    %1113 = vmatpush.msra.mxu0 0.0
    %1114 = vmatpush.msra.mxu0 0.0
    %1115 = vmatpush.msra.mxu0 0.0
    %1116 = vmatpush.msra.mxu0 %v704
    %1117 = vmatpush.msra.mxu0 %v703
    %1118 = vmatpush.msra.mxu0 %v702
    %1119 = vmatpush.msra.mxu0 %v701
    %1120 = vmatmul.f32.gmra.mxu0 %v1102
    %v1121 = vpop.f32.mrf.mxu0
    %v1122 = vadd.f32 0.0, %v1121
    %1123 = vdwg.mxu0
    %v1124 = vadd.f32 %v770, %v1122
    %v1125 = vxor.u32 %v1124, 2147483648
    %v1126 = vmul.f32 %v1125, 1.442695
    %v1127 = vpow.pop %v1126
    %v1128 = vadd.f32 %v1127, 1.0
    %v1129 = vrcp.pop %v1128
    %v1130 = vmul.f32 %v1128, %v1129
    %v1131 = vsub.f32 1.0, %v1130
    %v1132 = vmul.f32 %v1129, %v1131
    %v1133 = vadd.f32 %v1129, %v1132
    %vm1134 = vweird.f32 %v1128
    %vm1135 = vweird.f32 %v1129
    %vm1136 = vmor %vm1134, %vm1135
    %v1137 = vsel %vm1136, %v1129, %v1133
    %v1138 = vand.u32 2147483647, %v1128
    %vm1139 = vcmp.eq.f32.partialorder %v1138, 8.507059e+37
    %v1140 = vand.u32 %v1128, 2147483648
    %v1141 = vor.u32 1.1754944e-38, %v1140
    %v1142 = vsel %vm1139, %v1141, %v1137
    %v1143 = vmul.f32 1.0, %v1142
    %v1144 = vtanh.pop %v1124
    %v1145 = vmul.f32 %v1143, %v1090
    %1147 = vrot.lane.b32.xlu0 %v1144, 64
    %v1148 = vpop.permute.xlu0 %1147
    %v1150 = vmul.f32 %v1143, %v1148
    %1152 = vrot.lane.b32.xlu0 %v1150, 32
    %v1153 = vpop.permute.xlu0 %1152
    %v1155 = vadd.f32 %v1145, %v1153
    %v1156 = vtanh.pop %v1155
    %1158 = vrot.lane.b32.xlu0 %v1156, 64
    %v1159 = vpop.permute.xlu0 %1158
    %v1161 = vmul.f32 %v1143, %v1159
    %1163 = vst [vmem:[#allocation1] ss:$4 sm:$0xff] %v1161
    %v1164 = vld.sshfl [vmem:[#allocation1] sm:$0xff pattern:$0x73625140]
    %1165 = vrot.lane.b32.xlu0 %v1164, 32
    %v1166 = vpop.permute.xlu0 %1165
    %v1167 = vsel %vm163, %v1166, 0
    %1169 = vmatpush.msra.mxu0 0.0
    %1170 = vmatpush.msra.mxu0 0.0
    %1171 = vmatpush.msra.mxu0 0.0
    %1172 = vmatpush.msra.mxu0 0.0
    %1173 = vmatpush.msra.mxu0 0.0
    %1174 = vmatpush.msra.mxu0 0.0
    %1175 = vmatpush.msra.mxu0 0.0
    %1176 = vmatpush.msra.mxu0 0.0
    %1177 = vmatpush.msra.mxu0 0.0
    %1178 = vmatpush.msra.mxu0 0.0
    %1179 = vmatpush.msra.mxu0 0.0
    %1180 = vmatpush.msra.mxu0 0.0
    %1181 = vmatpush.msra.mxu0 %v704
    %1182 = vmatpush.msra.mxu0 %v703
    %1183 = vmatpush.msra.mxu0 %v702
    %1184 = vmatpush.msra.mxu0 %v701
    %1185 = vmatmul.f32.gmra.mxu0 %v1167
    %v1186 = vpop.f32.mrf.mxu0
    %v1187 = vadd.f32 0.0, %v1186
    %1188 = vdwg.mxu0
    %v1189 = vadd.f32 %v771, %v1187
    %v1190 = vxor.u32 %v1189, 2147483648
    %v1191 = vmul.f32 %v1190, 1.442695
    %v1192 = vpow.pop %v1191
    %v1193 = vadd.f32 %v1192, 1.0
    %v1194 = vrcp.pop %v1193
    %v1195 = vmul.f32 %v1193, %v1194
    %v1196 = vsub.f32 1.0, %v1195
    %v1197 = vmul.f32 %v1194, %v1196
    %v1198 = vadd.f32 %v1194, %v1197
    %vm1199 = vweird.f32 %v1193
    %vm1200 = vweird.f32 %v1194
    %vm1201 = vmor %vm1199, %vm1200
    %v1202 = vsel %vm1201, %v1194, %v1198
    %v1203 = vand.u32 2147483647, %v1193
    %vm1204 = vcmp.eq.f32.partialorder %v1203, 8.507059e+37
    %v1205 = vand.u32 %v1193, 2147483648
    %v1206 = vor.u32 1.1754944e-38, %v1205
    %v1207 = vsel %vm1204, %v1206, %v1202
    %v1208 = vmul.f32 1.0, %v1207
    %v1209 = vtanh.pop %v1189
    %v1210 = vmul.f32 %v1208, %v1155
    %1212 = vrot.lane.b32.xlu0 %v1209, 64
    %v1213 = vpop.permute.xlu0 %1212
    %v1215 = vmul.f32 %v1208, %v1213
    %1217 = vrot.lane.b32.xlu0 %v1215, 32
    %v1218 = vpop.permute.xlu0 %1217
    %v1220 = vadd.f32 %v1210, %v1218
    %v1221 = vtanh.pop %v1220
    %1223 = vrot.lane.b32.xlu0 %v1221, 64
    %v1224 = vpop.permute.xlu0 %1223
    %v1226 = vmul.f32 %v1208, %v1224
    %1228 = vst [vmem:[#allocation1] ss:$4 sm:$0xff] %v1226
    %v1229 = vld.sshfl [vmem:[#allocation1] sm:$0xff pattern:$0x73625140]
    %1230 = vrot.lane.b32.xlu0 %v1229, 32
    %v1231 = vpop.permute.xlu0 %1230
    %v1232 = vsel %vm163, %v1231, 0
    %1234 = vmatpush.msra.mxu0 0.0
    %1235 = vmatpush.msra.mxu0 0.0
    %1236 = vmatpush.msra.mxu0 0.0
    %1237 = vmatpush.msra.mxu0 0.0
    %1238 = vmatpush.msra.mxu0 0.0
    %1239 = vmatpush.msra.mxu0 0.0
    %1240 = vmatpush.msra.mxu0 0.0
    %1241 = vmatpush.msra.mxu0 0.0
    %1242 = vmatpush.msra.mxu0 0.0
    %1243 = vmatpush.msra.mxu0 0.0
    %1244 = vmatpush.msra.mxu0 0.0
    %1245 = vmatpush.msra.mxu0 0.0
    %1246 = vmatpush.msra.mxu0 %v704
    %1247 = vmatpush.msra.mxu0 %v703
    %1248 = vmatpush.msra.mxu0 %v702
    %1249 = vmatpush.msra.mxu0 %v701
    %1250 = vmatmul.f32.gmra.mxu0 %v1232
    %v1251 = vpop.f32.mrf.mxu0
    %v1252 = vadd.f32 0.0, %v1251
    %1253 = vdwg.mxu0
    %v1254 = vadd.f32 %v772, %v1252
    %v1255 = vxor.u32 %v1254, 2147483648
    %v1256 = vmul.f32 %v1255, 1.442695
    %v1257 = vpow.pop %v1256
    %v1258 = vadd.f32 %v1257, 1.0
    %v1259 = vrcp.pop %v1258
    %v1260 = vmul.f32 %v1258, %v1259
    %v1261 = vsub.f32 1.0, %v1260
    %v1262 = vmul.f32 %v1259, %v1261
    %v1263 = vadd.f32 %v1259, %v1262
    %vm1264 = vweird.f32 %v1258
    %vm1265 = vweird.f32 %v1259
    %vm1266 = vmor %vm1264, %vm1265
    %v1267 = vsel %vm1266, %v1259, %v1263
    %v1268 = vand.u32 2147483647, %v1258
    %vm1269 = vcmp.eq.f32.partialorder %v1268, 8.507059e+37
    %v1270 = vand.u32 %v1258, 2147483648
    %v1271 = vor.u32 1.1754944e-38, %v1270
    %v1272 = vsel %vm1269, %v1271, %v1267
    %v1273 = vmul.f32 1.0, %v1272
    %v1274 = vtanh.pop %v1254
    %v1275 = vmul.f32 %v1273, %v1220
    %1277 = vrot.lane.b32.xlu0 %v1274, 64
    %v1278 = vpop.permute.xlu0 %1277
    %v1280 = vmul.f32 %v1273, %v1278
    %1282 = vrot.lane.b32.xlu0 %v1280, 32
    %v1283 = vpop.permute.xlu0 %1282
    %v1285 = vadd.f32 %v1275, %v1283
    %v1286 = vtanh.pop %v1285
    %1288 = vrot.lane.b32.xlu0 %v1286, 64
    %v1289 = vpop.permute.xlu0 %1288
    %v1291 = vmul.f32 %v1273, %v1289
    %v1292 = vld [vmem:[%s7] sm:$0xff]
    %v1293 = vld [vmem:[%s7 + $0x8] sm:$0xff]
    %v1294 = vld [vmem:[%s7 + $0x10] sm:$0xff]
    %v1295 = vld [vmem:[%s7 + $0x18] sm:$0xff]
    %v1296 = vld [vmem:[%s8] sm:$0x1]
    %v1298 = vperm.slane %v1296, 0
    %1301 = vst [vmem:[#allocation1] ss:$4 sm:$0xff] %v1291
    %v1302 = vld.sshfl [vmem:[#allocation1] sm:$0xff pattern:$0x73625140]
    %1303 = vrot.lane.b32.xlu0 %v1302, 32
    %v1304 = vpop.permute.xlu0 %1303
    %v1305 = vsel %vm163, %v1304, 0
    %1307 = vmatpush.msra.mxu0 0.0
    %1308 = vmatpush.msra.mxu0 0.0
    %1309 = vmatpush.msra.mxu0 0.0
    %1310 = vmatpush.msra.mxu0 0.0
    %1311 = vmatpush.msra.mxu0 0.0
    %1312 = vmatpush.msra.mxu0 0.0
    %1313 = vmatpush.msra.mxu0 0.0
    %1314 = vmatpush.msra.mxu0 0.0
    %1315 = vmatpush.msra.mxu0 0.0
    %1316 = vmatpush.msra.mxu0 0.0
    %1317 = vmatpush.msra.mxu0 0.0
    %1318 = vmatpush.msra.mxu0 0.0
    %1319 = vmatpush.msra.mxu0 %v1295
    %1320 = vmatpush.msra.mxu0 %v1294
    %1321 = vmatpush.msra.mxu0 %v1293
    %1322 = vmatpush.msra.mxu0 %v1292
    %1323 = vmatmul.f32.gmra.mxu0 %v1305
    %v1324 = vpop.f32.mrf.mxu0
    %v1325 = vadd.f32 %v1298, %v1324
    %1326 = vdwg.mxu0
    %vm1327 = vcmask 25600
    %1328 = vst.msk [vmem:[#allocation8] sm:$0x3] %vm1327, %v1325
    // Predicated region
    $region46: #{tpu_custom_call.1} parent=1 // pred_check
      _
    $region47: #{tpu_custom_call.1} parent=1 // pred_check_branch
      %1330 = sbr.rel (0) target = $region49
    $region48: #{tpu_custom_call.1} parent=1 // pred_region
      %1332 = vsyncadd [#allocation5], 0
      %s1334 = sshll.u32 [#allocation8], 4
      %s1335 = int_to_ptr.vmem [resolvable:$true] %s1334
      %s1336 = sshll.u32 %s9, 4
      %s1337 = int_to_ptr.hbm [resolvable:$true] %s1336
      %1339 = dma.vmem_to_hbm [thread:$0]  %s1335, 32, %s1337, [#allocation5]
    $region49: #{tpu_custom_call.1} parent=1 // pred_fallthru
      _
    // Predicated region
    $region50: #{tpu_custom_call.1} parent=1 // pred_check
      _
    $region51: #{tpu_custom_call.1} parent=1 // pred_check_branch
      %1341 = sbr.rel (0) target = $region53
    $region52: #{tpu_custom_call.1} parent=1 // pred_region
      %1343 = dma.done [#allocation5], 32
    $region53: #{tpu_custom_call.1} parent=1 // pred_fallthru
      _
    %1344 = vsyncpa [#allocation4], 1
    %1345 = vsyncpa [#allocation7], 1
    %1346 = vsyncpa [#allocation5], 1

</llo_original>
